<compile_context>
chip_gen: v7x
topology: tpu7x:2x2x1
jax: 0.10.0
libtpu: 0.0.40
codegen_flags: <defaults>
</compile_context>

<pallas_src>
import functools

import jax
import jax.numpy as jnp
from jax.experimental import pallas as pl
from jax.experimental.pallas import tpu as pltpu

LANES = 128   # output channels are padded to this many lanes (lane-dense stores)
EPS = 1e-5
MAX_TM = 128  # per-step output rows; keeps the f32 accumulator at <=16 vregs


# ---------------------------------------------------------------------------
# Pallas kernel: y[r] = relu( concat_t(x[r + off_t]) @ W + shift )   (one wide-K GEMM)
# ---------------------------------------------------------------------------
def _tap_gemm_kernel(x_ref, w_ref, shift_ref, o_ref, *, tm, halo, offsets):
    # x_ref:     (R_tot, Cin)      bf16, whole slab resident in VMEM
    # w_ref:     (T*Cin, 128)      bf16, BN scale already folded in
    # shift_ref: (1, 128)          f32
    # o_ref:     (tm, 128)         bf16 or f32 block for grid step i
    base = pl.multiple_of(pl.program_id(0) * tm, 8)
    xt = x_ref[pl.ds(base, tm + halo), :]             # one aligned window load
    # Concatenate the row-shifted tap slices along lanes -> single K = T*Cin matmul.
    xcat = jnp.concatenate([xt[off:off + tm, :] for off in offsets], axis=-1)
    acc = jnp.dot(xcat, w_ref[...], preferred_element_type=jnp.float32)
    # NOTE: rows >= R (padding tail) produce relu(shift); the wrapper slices them off.
    o_ref[...] = jnp.maximum(acc + shift_ref[...], 0.0).astype(o_ref.dtype)


def _conv_rows(x2d, w2, shift, offsets, *, out_dtype, max_tm=MAX_TM):
    """Row-shifted fused-K GEMM.  x2d: (R, C), w2: (T*C, 128) bf16, shift: (1, 128) f32.
    Returns (R_pad, 128) out_dtype; caller slices [:R]."""
    R, C = x2d.shape
    K = w2.shape[0]
    max_off = max(int(o) for o in offsets)
    halo = -(-max_off // 8) * 8                        # halo rows, multiple of 8
    n_tiles = -(-R // max_tm)                          # no forced >=2 (1-TC chips)
    tm = (-(-R // n_tiles) + 7) // 8 * 8               # balanced tile, multiple of 8
    r_pad = tm * n_tiles
    r_tot = r_pad + halo

    x_p = jnp.zeros((r_tot, C), jnp.bfloat16).at[:R, :].set(x2d.astype(jnp.bfloat16))

    kernel = functools.partial(_tap_gemm_kernel, tm=tm, halo=halo,
                               offsets=tuple(int(o) for o in offsets))
    out_bytes = r_pad * LANES * jnp.dtype(out_dtype).itemsize
    cost = pl.CostEstimate(
        flops=2 * r_pad * K * LANES,
        transcendentals=0,
        bytes_accessed=r_tot * C * 2 + K * LANES * 2 + LANES * 4 + out_bytes)

    return pl.pallas_call(
        kernel,
        out_shape=jax.ShapeDtypeStruct((r_pad, LANES), out_dtype),
        grid=(n_tiles,),
        in_specs=[
            pl.BlockSpec((r_tot, C), lambda i: (0, 0)),        # whole slab, fetched once
            pl.BlockSpec((K, LANES), lambda i: (0, 0)),
            pl.BlockSpec((1, LANES), lambda i: (0, 0)),
        ],
        out_specs=pl.BlockSpec((tm, LANES), lambda i: (i, 0)),
        compiler_params=pltpu.CompilerParams(
            dimension_semantics=("parallel",),
            vmem_limit_bytes=48 * 1024 * 1024),
        cost_estimate=cost,
    )(x_p, w2, shift)


# ---------------------------------------------------------------------------
# Layer wrappers (cheap XLA glue: pad / space-to-depth / reshape / slice)
# ---------------------------------------------------------------------------
def _layer_stride2(x, w2, shift, cout, out_dtype):
    """Conv3d(k=3, stride=2, pad=1) + BN(eval) + ReLU via 2x2x2 space-to-depth."""
    N, D, H, W, C = x.shape
    pd, ph, pw = 1 + (D % 2), 1 + (H % 2), 1 + (W % 2)     # conv pad + even-ing pad
    xp = jnp.pad(x, ((0, 0), (1, pd), (1, ph), (1, pw), (0, 0)))
    Dp, Hp, Wp = xp.shape[1], xp.shape[2], xp.shape[3]
    Dq, Hq, Wq = Dp // 2, Hp // 2, Wp // 2
    xs = xp.reshape(N, Dq, 2, Hq, 2, Wq, 2, C)
    xs = xs.transpose(0, 1, 3, 5, 2, 4, 6, 7).reshape(N, Dq, Hq, Wq, 8 * C)
    R = N * Dq * Hq * Wq
    offsets = tuple(bd * Hq * Wq + bh * Wq + bw
                    for bd in range(2) for bh in range(2) for bw in range(2))
    y = _conv_rows(xs.reshape(R, 8 * C), w2, shift, offsets, out_dtype=out_dtype)
    y = y[:R].reshape(N, Dq, Hq, Wq, LANES)
    # stride-2 successors always need real channels (keeps space-to-depth K small)
    return y[:, :Dq - 1, :Hq - 1, :Wq - 1, :cout]


def _layer_2din3d(x, w2, shift, cout, out_dtype, keep_lanes):
    """Conv3d(k=(1,3,3), stride=1, pad=(0,1,1)) + BN(eval) + ReLU."""
    N, D, H, W, C = x.shape
    xp = jnp.pad(x, ((0, 0), (0, 0), (1, 1), (1, 1), (0, 0)))
    Hp, Wp = H + 2, W + 2
    R = N * D * Hp * Wp
    offsets = tuple(kh * Wp + kw for kh in range(3) for kw in range(3))
    y = _conv_rows(xp.reshape(R, C), w2, shift, offsets, out_dtype=out_dtype)
    y = y[:R].reshape(N, D, Hp, Wp, LANES)
    y = y[:, :, :H, :W, :]
    # keep the 128-lane tensor flowing into a following op2d layer (no slice/re-pad)
    return y if keep_lanes else y[..., :cout]


# ---------------------------------------------------------------------------
# One-time parameter preparation (fold BN scale, pad to 128 lanes, cast bf16)
# ---------------------------------------------------------------------------
def _bn_fold(b, gamma, beta, rmean, rvar):
    s = gamma / jnp.sqrt(rvar + EPS)
    shift = (b - rmean) * s + beta
    return s, shift


def _prep_stride2(w, b, gamma, beta, rmean, rvar):
    cout, cin = w.shape[0], w.shape[1]
    s, shift = _bn_fold(b, gamma, beta, rmean, rvar)
    # equivalent 2x2x2 stride-1 weight over space-to-depth channels
    w2 = jnp.zeros((2, 2, 2, 8 * cin, cout), jnp.float32)
    for bd in range(2):
        for bh in range(2):
            for bw in range(2):
                for p_d in range(2):
                    for p_h in range(2):
                        for p_w in range(2):
                            kd, kh, kw = 2 * bd + p_d, 2 * bh + p_h, 2 * bw + p_w
                            if kd > 2 or kh > 2 or kw > 2:
                                continue
                            sub = (p_d * 2 + p_h) * 2 + p_w
                            w2 = w2.at[bd, bh, bw, sub * cin:(sub + 1) * cin, :].set(
                                w[:, :, kd, kh, kw].T)
    w2 = w2.reshape(8, 8 * cin, cout) * s[None, None, :]
    w2p = jnp.zeros((8, 8 * cin, LANES), jnp.float32).at[:, :, :cout].set(w2)
    w2p = w2p.reshape(8 * 8 * cin, LANES)              # (T*Cin, 128) for the fused-K GEMM
    shiftp = jnp.zeros((1, LANES), jnp.float32).at[0, :cout].set(shift)
    return dict(w2=w2p.astype(jnp.bfloat16), shift=shiftp)


def _prep_2din3d(w, b, gamma, beta, rmean, rvar, cin_in):
    cout, cin = w.shape[0], w.shape[1]
    s, shift = _bn_fold(b, gamma, beta, rmean, rvar)
    w2 = jnp.transpose(w[:, :, 0, :, :], (2, 3, 1, 0)).reshape(9, cin, cout)
    w2 = w2 * s[None, None, :]
    # zero-pad the input-channel rows up to cin_in (128 when previous layer keeps lanes)
    w2p = jnp.zeros((9, cin_in, LANES), jnp.float32).at[:, :cin, :cout].set(w2)
    w2p = w2p.reshape(9 * cin_in, LANES)               # (T*Cin_in, 128)
    shiftp = jnp.zeros((1, LANES), jnp.float32).at[0, :cout].set(shift)
    return dict(w2=w2p.astype(jnp.bfloat16), shift=shiftp)


# ---------------------------------------------------------------------------
# Encoder configuration, weights, forward
# ---------------------------------------------------------------------------
def make_encoder_cfgs(in_channels=4, layer=3, init_chan=8):
    """Static (python-int) per-layer configuration: (cin, cout, op2d)."""
    assert layer > 2
    cfgs = [(in_channels, init_chan, False), (init_chan, init_chan * 2, False)]
    for i in range(2, layer):
        expand = 2 ** (i - 1)
        cfgs.append((init_chan * expand, init_chan * expand * 2, True))
    return tuple(cfgs)


def make_encoder_weights(key, cfgs):
    """Raw PyTorch-layout parameters (deterministic init)."""
    weights = []
    for (cin, cout, op2d) in cfgs:
        key, kw, kb, kg, kbt = jax.random.split(key, 5)
        kshape = (1, 3, 3) if op2d else (3, 3, 3)
        fan_in = cin * kshape[0] * kshape[1] * kshape[2]
        w = jax.random.normal(kw, (cout, cin) + kshape, jnp.float32) / jnp.sqrt(fan_in)
        b = 0.01 * jax.random.normal(kb, (cout,), jnp.float32)
        gamma = 1.0 + 0.05 * jax.random.normal(kg, (cout,), jnp.float32)
        beta = 0.05 * jax.random.normal(kbt, (cout,), jnp.float32)
        weights.append(dict(w=w, b=b, gamma=gamma, beta=beta,
                            rmean=jnp.zeros((cout,), jnp.float32),
                            rvar=jnp.ones((cout,), jnp.float32)))
    return weights


def prepare_kernel_params(cfgs, weights):
    prepped = []
    for li, ((cin, cout, op2d), p) in enumerate(zip(cfgs, weights)):
        if op2d:
            prev_op2d = li > 0 and cfgs[li - 1][2]
            cin_in = LANES if prev_op2d else cin       # 128-lane input after an op2d layer
            prepped.append(_prep_2din3d(p["w"], p["b"], p["gamma"], p["beta"],
                                        p["rmean"], p["rvar"], cin_in))
        else:
            prepped.append(_prep_stride2(p["w"], p["b"], p["gamma"], p["beta"],
                                         p["rmean"], p["rvar"]))
    return tuple(prepped)


def build_forward(cfgs):
    """cfgs are static python values closed over (kept OUT of the jit pytree)."""
    op2d_flags = tuple(c[2] for c in cfgs)
    couts = tuple(c[1] for c in cfgs)
    n = len(cfgs)
    # keep 128 lanes flowing only between consecutive op2d layers
    keep_lanes = tuple(op2d_flags[i] and (i + 1 < n) and op2d_flags[i + 1]
                       for i in range(n))
    # bf16 inter-layer activations, f32 final output
    out_dtypes = tuple(jnp.bfloat16 if i < n - 1 else jnp.float32 for i in range(n))

    def forward(x_ncdhw, kparams):
        x = jnp.transpose(x_ncdhw, (0, 2, 3, 4, 1))     # NCDHW -> NDHWC
        for i, (op2d, cout, p) in enumerate(zip(op2d_flags, couts, kparams)):
            if op2d:
                x = _layer_2din3d(x, p["w2"], p["shift"], cout, out_dtypes[i],
                                  keep_lanes[i])
            else:
                x = _layer_stride2(x, p["w2"], p["shift"], cout, out_dtypes[i])
        return jnp.transpose(x, (0, 4, 1, 2, 3))        # NDHWC -> NCDHW

    return jax.jit(forward)


def reference_forward(x_ncdhw, cfgs, weights):
    """Pure-JAX (XLA conv) f32 reference, eval-mode BN."""
    x = jnp.transpose(x_ncdhw, (0, 2, 3, 4, 1))
    for (cin, cout, op2d), p in zip(cfgs, weights):
        stride = (1, 1, 1) if op2d else (2, 2, 2)
        pad = ((0, 0), (1, 1), (1, 1)) if op2d else ((1, 1), (1, 1), (1, 1))
        wt = jnp.transpose(p["w"], (2, 3, 4, 1, 0))     # (kD,kH,kW,Cin,Cout)
        y = jax.lax.conv_general_dilated(
            x, wt, window_strides=stride, padding=pad,
            dimension_numbers=("NDHWC", "DHWIO", "NDHWC"))
        y = y + p["b"]
        s = p["gamma"] / jnp.sqrt(p["rvar"] + EPS)
        y = (y - p["rmean"]) * s + p["beta"]
        x = jnp.maximum(y, 0.0)
    return jnp.transpose(x, (0, 4, 1, 2, 3))


if __name__ == "__main__":
    key = jax.random.PRNGKey(0)
    kx, kp = jax.random.split(key)

    # small deterministic input: (batch=2, in_channels=4, D=8, H=16, W=16)
    x = jax.random.normal(kx, (2, 4, 8, 16, 16), jnp.float32)
    cfgs = make_encoder_cfgs(in_channels=4, layer=3, init_chan=8)
    weights = make_encoder_weights(kp, cfgs)
    kparams = prepare_kernel_params(cfgs, weights)

    forward = build_forward(cfgs)
    out = jax.block_until_ready(forward(x, kparams))

    # layer=3, init_chan=8 -> final_chan = 32; spatial (8,16,16) -> (2,4,4)
    assert out.shape == (2, 32, 2, 4, 4), out.shape
    assert bool(jnp.all(jnp.isfinite(out)))

    # correctness check vs pure-JAX f32 reference (loose tolerance: bf16 MXU operands
    # and bf16 inter-layer activations)
    ref = reference_forward(x, cfgs, weights)
    assert bool(jnp.allclose(out, ref, rtol=5e-2, atol=1e-1)), \
        float(jnp.max(jnp.abs(out - ref)))

    print("KERNEL_OK")
</pallas_src>

<mosaic_0001>
module attributes {stable_mosaic.version = 11 : i64} {
  func.func @_tap_gemm_kernel(%arg0: i32, %arg1: memref<936x32xbf16, #tpu.memory_space<vmem>>, %arg2: memref<256x128xbf16, #tpu.memory_space<vmem>>, %arg3: memref<1x128xf32, #tpu.memory_space<vmem>>, %arg4: memref<120x128xbf16, #tpu.memory_space<vmem>>) attributes {dimension_semantics = [#tpu.dimension_semantics<parallel>], iteration_bounds = array<i64: 7>, scalar_prefetch = 0 : i64, scratch_operands = 0 : i64, tpu.core_type = #tpu.core_type<tc>, window_params = [{pipeline_mode = #tpu.pipeline_mode<synchronous>, transform_indices = @transform_0, window_bounds = array<i64: 936, 32>}, {pipeline_mode = #tpu.pipeline_mode<synchronous>, transform_indices = @transform_1, window_bounds = array<i64: 256, 128>}, {pipeline_mode = #tpu.pipeline_mode<synchronous>, transform_indices = @transform_2, window_bounds = array<i64: 1, 128>}, {transform_indices = @transform_3, window_bounds = array<i64: 120, 128>}]} {
    %c120_i32 = arith.constant 120 : i32
    %0 = arith.muli %arg0, %c120_i32 : i32
    %1 = tpu.assume_multiple %0, 8 : i32
    %2 = arith.index_cast %1 : i32 to index
    %c0 = arith.constant 0 : index
    %3 = vector.load %arg1[%2, %c0] : memref<936x32xbf16, #tpu.memory_space<vmem>>, vector<216x32xbf16>
    %4 = vector.extract_strided_slice %3 {offsets = [0, 0], sizes = [120, 32], strides = [1, 1]} : vector<216x32xbf16> to vector<120x32xbf16>
    %5 = vector.extract_strided_slice %3 {offsets = [1, 0], sizes = [120, 32], strides = [1, 1]} : vector<216x32xbf16> to vector<120x32xbf16>
    %6 = vector.extract_strided_slice %3 {offsets = [9, 0], sizes = [120, 32], strides = [1, 1]} : vector<216x32xbf16> to vector<120x32xbf16>
    %7 = vector.extract_strided_slice %3 {offsets = [10, 0], sizes = [120, 32], strides = [1, 1]} : vector<216x32xbf16> to vector<120x32xbf16>
    %8 = vector.extract_strided_slice %3 {offsets = [81, 0], sizes = [120, 32], strides = [1, 1]} : vector<216x32xbf16> to vector<120x32xbf16>
    %9 = vector.extract_strided_slice %3 {offsets = [82, 0], sizes = [120, 32], strides = [1, 1]} : vector<216x32xbf16> to vector<120x32xbf16>
    %10 = vector.extract_strided_slice %3 {offsets = [90, 0], sizes = [120, 32], strides = [1, 1]} : vector<216x32xbf16> to vector<120x32xbf16>
    %11 = vector.extract_strided_slice %3 {offsets = [91, 0], sizes = [120, 32], strides = [1, 1]} : vector<216x32xbf16> to vector<120x32xbf16>
    %12 = tpu.concatenate %4, %5, %6, %7, %8, %9, %10, %11 in 1 : vector<120x32xbf16>, vector<120x32xbf16>, vector<120x32xbf16>, vector<120x32xbf16>, vector<120x32xbf16>, vector<120x32xbf16>, vector<120x32xbf16>, vector<120x32xbf16> -> vector<120x256xbf16>
    %c0_0 = arith.constant 0 : index
    %c0_1 = arith.constant 0 : index
    %13 = vector.load %arg2[%c0_0, %c0_1] : memref<256x128xbf16, #tpu.memory_space<vmem>>, vector<256x128xbf16>
    %cst = arith.constant dense<0.000000e+00> : vector<120x128xf32>
    %14 = tpu.matmul %12, %13, %cst {dimension_numbers = #tpu.dot_dimension_numbers<[1], [0], [0], [1], [0, 0, 1, 1], [], []>} : vector<120x256xbf16>, vector<256x128xbf16>, vector<120x128xf32> -> vector<120x128xf32>
    %c0_2 = arith.constant 0 : index
    %c0_3 = arith.constant 0 : index
    %15 = vector.load %arg3[%c0_2, %c0_3] : memref<1x128xf32, #tpu.memory_space<vmem>>, vector<1x128xf32>
    %16 = vector.broadcast %15 : vector<1x128xf32> to vector<120x128xf32>
    %17 = arith.addf %14, %16 : vector<120x128xf32>
    %cst_4 = arith.constant 0.000000e+00 : f32
    %18 = vector.broadcast %cst_4 : f32 to vector<120x128xf32>
    %19 = arith.maximumf %17, %18 : vector<120x128xf32>
    %20 = arith.truncf %19 : vector<120x128xf32> to vector<120x128xbf16>
    %c0_5 = arith.constant 0 : index
    %c0_6 = arith.constant 0 : index
    %21 = vector.load %arg4[%c0_5, %c0_6] : memref<120x128xbf16, #tpu.memory_space<vmem>>, vector<120x128xbf16>
    tpu.vector_store %arg4[%c0_5, %c0_6], %20 {strides = array<i32>} : memref<120x128xbf16, #tpu.memory_space<vmem>>, vector<120x128xbf16>,
    return
  }
  func.func @transform_0(%arg0: i32) -> (i32, i32) {
    %c0_i32 = arith.constant 0 : i32
    %c0_i32_0 = arith.constant 0 : i32
    %c0_i32_1 = arith.constant 0 : i32
    return %c0_i32, %c0_i32_0 : i32, i32
  }
  func.func @transform_1(%arg0: i32) -> (i32, i32) {
    %c0_i32 = arith.constant 0 : i32
    %c0_i32_0 = arith.constant 0 : i32
    %c0_i32_1 = arith.constant 0 : i32
    return %c0_i32, %c0_i32_0 : i32, i32
  }
  func.func @transform_2(%arg0: i32) -> (i32, i32) {
    %c0_i32 = arith.constant 0 : i32
    %c0_i32_0 = arith.constant 0 : i32
    %c0_i32_1 = arith.constant 0 : i32
    return %c0_i32, %c0_i32_0 : i32, i32
  }
  func.func @transform_3(%arg0: i32) -> (i32, i32) {
    %c0_i32 = arith.constant 0 : i32
    %c0_i32_0 = arith.constant 0 : i32
    return %arg0, %c0_i32 : i32, i32
  }
}

module attributes {stable_mosaic.version = 11 : i64} {
  func.func @_tap_gemm_kernel(%arg0: i32, %arg1: memref<192x64xbf16, #tpu.memory_space<vmem>>, %arg2: memref<512x128xbf16, #tpu.memory_space<vmem>>, %arg3: memref<1x128xf32, #tpu.memory_space<vmem>>, %arg4: memref<80x128xbf16, #tpu.memory_space<vmem>>) attributes {dimension_semantics = [#tpu.dimension_semantics<parallel>], iteration_bounds = array<i64: 2>, scalar_prefetch = 0 : i64, scratch_operands = 0 : i64, tpu.core_type = #tpu.core_type<tc>, window_params = [{pipeline_mode = #tpu.pipeline_mode<synchronous>, transform_indices = @transform_0, window_bounds = array<i64: 192, 64>}, {pipeline_mode = #tpu.pipeline_mode<synchronous>, transform_indices = @transform_1, window_bounds = array<i64: 512, 128>}, {pipeline_mode = #tpu.pipeline_mode<synchronous>, transform_indices = @transform_2, window_bounds = array<i64: 1, 128>}, {transform_indices = @transform_3, window_bounds = array<i64: 80, 128>}]} {
    %c80_i32 = arith.constant 80 : i32
    %0 = arith.muli %arg0, %c80_i32 : i32
    %1 = tpu.assume_multiple %0, 8 : i32
    %2 = arith.index_cast %1 : i32 to index
    %c0 = arith.constant 0 : index
    %3 = vector.load %arg1[%2, %c0] : memref<192x64xbf16, #tpu.memory_space<vmem>>, vector<112x64xbf16>
    %4 = vector.extract_strided_slice %3 {offsets = [0, 0], sizes = [80, 64], strides = [1, 1]} : vector<112x64xbf16> to vector<80x64xbf16>
    %5 = vector.extract_strided_slice %3 {offsets = [1, 0], sizes = [80, 64], strides = [1, 1]} : vector<112x64xbf16> to vector<80x64xbf16>
    %6 = vector.extract_strided_slice %3 {offsets = [5, 0], sizes = [80, 64], strides = [1, 1]} : vector<112x64xbf16> to vector<80x64xbf16>
    %7 = vector.extract_strided_slice %3 {offsets = [6, 0], sizes = [80, 64], strides = [1, 1]} : vector<112x64xbf16> to vector<80x64xbf16>
    %8 = vector.extract_strided_slice %3 {offsets = [25, 0], sizes = [80, 64], strides = [1, 1]} : vector<112x64xbf16> to vector<80x64xbf16>
    %9 = vector.extract_strided_slice %3 {offsets = [26, 0], sizes = [80, 64], strides = [1, 1]} : vector<112x64xbf16> to vector<80x64xbf16>
    %10 = vector.extract_strided_slice %3 {offsets = [30, 0], sizes = [80, 64], strides = [1, 1]} : vector<112x64xbf16> to vector<80x64xbf16>
    %11 = vector.extract_strided_slice %3 {offsets = [31, 0], sizes = [80, 64], strides = [1, 1]} : vector<112x64xbf16> to vector<80x64xbf16>
    %12 = tpu.concatenate %4, %5, %6, %7, %8, %9, %10, %11 in 1 : vector<80x64xbf16>, vector<80x64xbf16>, vector<80x64xbf16>, vector<80x64xbf16>, vector<80x64xbf16>, vector<80x64xbf16>, vector<80x64xbf16>, vector<80x64xbf16> -> vector<80x512xbf16>
    %c0_0 = arith.constant 0 : index
    %c0_1 = arith.constant 0 : index
    %13 = vector.load %arg2[%c0_0, %c0_1] : memref<512x128xbf16, #tpu.memory_space<vmem>>, vector<512x128xbf16>
    %cst = arith.constant dense<0.000000e+00> : vector<80x128xf32>
    %14 = tpu.matmul %12, %13, %cst {dimension_numbers = #tpu.dot_dimension_numbers<[1], [0], [0], [1], [0, 0, 1, 1], [], []>} : vector<80x512xbf16>, vector<512x128xbf16>, vector<80x128xf32> -> vector<80x128xf32>
    %c0_2 = arith.constant 0 : index
    %c0_3 = arith.constant 0 : index
    %15 = vector.load %arg3[%c0_2, %c0_3] : memref<1x128xf32, #tpu.memory_space<vmem>>, vector<1x128xf32>
    %16 = vector.broadcast %15 : vector<1x128xf32> to vector<80x128xf32>
    %17 = arith.addf %14, %16 : vector<80x128xf32>
    %cst_4 = arith.constant 0.000000e+00 : f32
    %18 = vector.broadcast %cst_4 : f32 to vector<80x128xf32>
    %19 = arith.maximumf %17, %18 : vector<80x128xf32>
    %20 = arith.truncf %19 : vector<80x128xf32> to vector<80x128xbf16>
    %c0_5 = arith.constant 0 : index
    %c0_6 = arith.constant 0 : index
    %21 = vector.load %arg4[%c0_5, %c0_6] : memref<80x128xbf16, #tpu.memory_space<vmem>>, vector<80x128xbf16>
    tpu.vector_store %arg4[%c0_5, %c0_6], %20 {strides = array<i32>} : memref<80x128xbf16, #tpu.memory_space<vmem>>, vector<80x128xbf16>,
    return
  }
  func.func @transform_0(%arg0: i32) -> (i32, i32) {
    %c0_i32 = arith.constant 0 : i32
    %c0_i32_0 = arith.constant 0 : i32
    %c0_i32_1 = arith.constant 0 : i32
    return %c0_i32, %c0_i32_0 : i32, i32
  }
  func.func @transform_1(%arg0: i32) -> (i32, i32) {
    %c0_i32 = arith.constant 0 : i32
    %c0_i32_0 = arith.constant 0 : i32
    %c0_i32_1 = arith.constant 0 : i32
    return %c0_i32, %c0_i32_0 : i32, i32
  }
  func.func @transform_2(%arg0: i32) -> (i32, i32) {
    %c0_i32 = arith.constant 0 : i32
    %c0_i32_0 = arith.constant 0 : i32
    %c0_i32_1 = arith.constant 0 : i32
    return %c0_i32, %c0_i32_0 : i32, i32
  }
  func.func @transform_3(%arg0: i32) -> (i32, i32) {
    %c0_i32 = arith.constant 0 : i32
    %c0_i32_0 = arith.constant 0 : i32
    return %arg0, %c0_i32 : i32, i32
  }
}

module attributes {stable_mosaic.version = 11 : i64} {
  func.func @_tap_gemm_kernel(%arg0: i32, %arg1: memref<160x16xbf16, #tpu.memory_space<vmem>>, %arg2: memref<144x128xbf16, #tpu.memory_space<vmem>>, %arg3: memref<1x128xf32, #tpu.memory_space<vmem>>, %arg4: memref<72x128xf32, #tpu.memory_space<vmem>>) attributes {dimension_semantics = [#tpu.dimension_semantics<parallel>], iteration_bounds = array<i64: 2>, scalar_prefetch = 0 : i64, scratch_operands = 0 : i64, tpu.core_type = #tpu.core_type<tc>, window_params = [{pipeline_mode = #tpu.pipeline_mode<synchronous>, transform_indices = @transform_0, window_bounds = array<i64: 160, 16>}, {pipeline_mode = #tpu.pipeline_mode<synchronous>, transform_indices = @transform_1, window_bounds = array<i64: 144, 128>}, {pipeline_mode = #tpu.pipeline_mode<synchronous>, transform_indices = @transform_2, window_bounds = array<i64: 1, 128>}, {transform_indices = @transform_3, window_bounds = array<i64: 72, 128>}]} {
    %c72_i32 = arith.constant 72 : i32
    %0 = arith.muli %arg0, %c72_i32 : i32
    %1 = tpu.assume_multiple %0, 8 : i32
    %2 = arith.index_cast %1 : i32 to index
    %c0 = arith.constant 0 : index
    %3 = vector.load %arg1[%2, %c0] : memref<160x16xbf16, #tpu.memory_space<vmem>>, vector<88x16xbf16>
    %4 = vector.extract_strided_slice %3 {offsets = [0, 0], sizes = [72, 16], strides = [1, 1]} : vector<88x16xbf16> to vector<72x16xbf16>
    %5 = vector.extract_strided_slice %3 {offsets = [1, 0], sizes = [72, 16], strides = [1, 1]} : vector<88x16xbf16> to vector<72x16xbf16>
    %6 = vector.extract_strided_slice %3 {offsets = [2, 0], sizes = [72, 16], strides = [1, 1]} : vector<88x16xbf16> to vector<72x16xbf16>
    %7 = vector.extract_strided_slice %3 {offsets = [6, 0], sizes = [72, 16], strides = [1, 1]} : vector<88x16xbf16> to vector<72x16xbf16>
    %8 = vector.extract_strided_slice %3 {offsets = [7, 0], sizes = [72, 16], strides = [1, 1]} : vector<88x16xbf16> to vector<72x16xbf16>
    %9 = vector.extract_strided_slice %3 {offsets = [8, 0], sizes = [72, 16], strides = [1, 1]} : vector<88x16xbf16> to vector<72x16xbf16>
    %10 = vector.extract_strided_slice %3 {offsets = [12, 0], sizes = [72, 16], strides = [1, 1]} : vector<88x16xbf16> to vector<72x16xbf16>
    %11 = vector.extract_strided_slice %3 {offsets = [13, 0], sizes = [72, 16], strides = [1, 1]} : vector<88x16xbf16> to vector<72x16xbf16>
    %12 = vector.extract_strided_slice %3 {offsets = [14, 0], sizes = [72, 16], strides = [1, 1]} : vector<88x16xbf16> to vector<72x16xbf16>
    %13 = tpu.concatenate %4, %5, %6, %7, %8, %9, %10, %11, %12 in 1 : vector<72x16xbf16>, vector<72x16xbf16>, vector<72x16xbf16>, vector<72x16xbf16>, vector<72x16xbf16>, vector<72x16xbf16>, vector<72x16xbf16>, vector<72x16xbf16>, vector<72x16xbf16> -> vector<72x144xbf16>
    %c0_0 = arith.constant 0 : index
    %c0_1 = arith.constant 0 : index
    %14 = vector.load %arg2[%c0_0, %c0_1] : memref<144x128xbf16, #tpu.memory_space<vmem>>, vector<144x128xbf16>
    %cst = arith.constant dense<0.000000e+00> : vector<72x128xf32>
    %15 = tpu.matmul %13, %14, %cst {dimension_numbers = #tpu.dot_dimension_numbers<[1], [0], [0], [1], [0, 0, 1, 1], [], []>} : vector<72x144xbf16>, vector<144x128xbf16>, vector<72x128xf32> -> vector<72x128xf32>
    %c0_2 = arith.constant 0 : index
    %c0_3 = arith.constant 0 : index
    %16 = vector.load %arg3[%c0_2, %c0_3] : memref<1x128xf32, #tpu.memory_space<vmem>>, vector<1x128xf32>
    %17 = vector.broadcast %16 : vector<1x128xf32> to vector<72x128xf32>
    %18 = arith.addf %15, %17 : vector<72x128xf32>
    %cst_4 = arith.constant 0.000000e+00 : f32
    %19 = vector.broadcast %cst_4 : f32 to vector<72x128xf32>
    %20 = arith.maximumf %18, %19 : vector<72x128xf32>
    %c0_5 = arith.constant 0 : index
    %c0_6 = arith.constant 0 : index
    %21 = vector.load %arg4[%c0_5, %c0_6] : memref<72x128xf32, #tpu.memory_space<vmem>>, vector<72x128xf32>
    tpu.vector_store %arg4[%c0_5, %c0_6], %20 {strides = array<i32>} : memref<72x128xf32, #tpu.memory_space<vmem>>, vector<72x128xf32>,
    return
  }
  func.func @transform_0(%arg0: i32) -> (i32, i32) {
    %c0_i32 = arith.constant 0 : i32
    %c0_i32_0 = arith.constant 0 : i32
    %c0_i32_1 = arith.constant 0 : i32
    return %c0_i32, %c0_i32_0 : i32, i32
  }
  func.func @transform_1(%arg0: i32) -> (i32, i32) {
    %c0_i32 = arith.constant 0 : i32
    %c0_i32_0 = arith.constant 0 : i32
    %c0_i32_1 = arith.constant 0 : i32
    return %c0_i32, %c0_i32_0 : i32, i32
  }
  func.func @transform_2(%arg0: i32) -> (i32, i32) {
    %c0_i32 = arith.constant 0 : i32
    %c0_i32_0 = arith.constant 0 : i32
    %c0_i32_1 = arith.constant 0 : i32
    return %c0_i32, %c0_i32_0 : i32, i32
  }
  func.func @transform_3(%arg0: i32) -> (i32, i32) {
    %c0_i32 = arith.constant 0 : i32
    %c0_i32_0 = arith.constant 0 : i32
    return %arg0, %c0_i32 : i32, i32
  }
}

</mosaic_0001>

<llo_original>
// kernel: forward.3
$region0: #{forward.3}
  #allocation0 [shape = 'u32[]', space=smem, size = 0x4, offset = 0x4, fixed_abs, tag = 'smem constant byte address 0x4 - core index']
  #allocation1 [shape = 'u32[144,128]{1,0:T(1,128)}', space=vmem, size = 0x12000, scoped, tag = 'internal scratch']
  %s0 = inlined_call_operand.vmem [shape: bf16[936,32], index: 0, kind: input, shape index: {}]
  %s1 = inlined_call_operand.vmem [shape: bf16[256,128], index: 1, kind: input, shape index: {}]
  %s2 = inlined_call_operand.vmem [shape: f32[1,128], index: 2, kind: input, shape index: {}]
  %s3 = inlined_call_operand.vmem [shape: bf16[840,128], index: 3, kind: output, shape index: {}]
  %s4 = sld [smem:[#allocation0]]
  $region45: #{forward.3} parent=0
    _
  %s6 = ssub.s32 1, %s4
  %s7 = scalar_select 0, %s6, %s4
  loop: start=0, step=1, limit=9
  $region2: #{forward.3} parent=0 // loop_pre_header
    _
  $region3: #{forward.3} parent=0 // loop_header
    %s9 = sphi 0, %s13
    %p10 = scmp.ge.s32.totalorder %s9, 9
    %s17 = sphi 0, %s17
    %s19 = sphi 0, %s17
    %s20 = sphi 0, %s19
    %s34 = sphi 0, %s20
    %s38 = sphi 0, %s38
    %s40 = sphi 0, %s38
    %s41 = sphi 0, %s40
    %s55 = sphi 0, %s41
    %s59 = sphi 0, %s59
    %s61 = sphi 0, %s59
    %s62 = sphi 0, %s61
    %s76 = sphi 0, %s62
    %s82 = sphi 0, %s84
    %s85 = sphi 0, %s82
    %s86 = sphi 0, %s85
    %s102 = sphi 0, %s86
  $region4: #{forward.3} parent=0 // loop_header_branch
    %12 = sbr.rel (%p10) target = $region8
  $region5: #{forward.3} parent=0 // loop_body
    %s14 = ssub.s32 %s9, 1
    %s15 = ssub.s32 %s9, 2
    %s16 = sadd.s32 %s9, 1
    %s18 = sadd.s32 %s17, 1
    %p21 = scmp.eq.s32.totalorder %s9, 6
    %p22 = scmp.ne.s32.totalorder %s17, %s19
    %p23 = scmp.eq.s32.totalorder %s9, 0
    %p24 = por %p22, %p23
    %p25 = scmp.ne.s32.totalorder %s17, %s19
    %p26 = scmp.eq.s32.totalorder %s14, 6
    %p27 = por %p25, %p26
    %p28 = scmp.ne.s32.totalorder %s19, %s20
    %p29 = scmp.eq.s32.totalorder %s14, 0
    %p30 = por %p28, %p29
    %p31 = scmp.ne.s32.totalorder %s19, %s20
    %p32 = scmp.eq.s32.totalorder %s15, 6
    %p33 = por %p31, %p32
    %p35 = scmp.ne.s32.totalorder %s20, %s34
    %p36 = scmp.eq.s32.totalorder %s15, 0
    %p37 = por %p35, %p36
    %s39 = sadd.s32 %s38, 1
    %p42 = scmp.eq.s32.totalorder %s9, 6
    %p43 = scmp.ne.s32.totalorder %s38, %s40
    %p44 = scmp.eq.s32.totalorder %s9, 0
    %p45 = por %p43, %p44
    %p46 = scmp.ne.s32.totalorder %s38, %s40
    %p47 = scmp.eq.s32.totalorder %s14, 6
    %p48 = por %p46, %p47
    %p49 = scmp.ne.s32.totalorder %s40, %s41
    %p50 = scmp.eq.s32.totalorder %s14, 0
    %p51 = por %p49, %p50
    %p52 = scmp.ne.s32.totalorder %s40, %s41
    %p53 = scmp.eq.s32.totalorder %s15, 6
    %p54 = por %p52, %p53
    %p56 = scmp.ne.s32.totalorder %s41, %s55
    %p57 = scmp.eq.s32.totalorder %s15, 0
    %p58 = por %p56, %p57
    %s60 = sadd.s32 %s59, 1
    %p63 = scmp.eq.s32.totalorder %s9, 6
    %p64 = scmp.ne.s32.totalorder %s59, %s61
    %p65 = scmp.eq.s32.totalorder %s9, 0
    %p66 = por %p64, %p65
    %p67 = scmp.ne.s32.totalorder %s59, %s61
    %p68 = scmp.eq.s32.totalorder %s14, 6
    %p69 = por %p67, %p68
    %p70 = scmp.ne.s32.totalorder %s61, %s62
    %p71 = scmp.eq.s32.totalorder %s14, 0
    %p72 = por %p70, %p71
    %p73 = scmp.ne.s32.totalorder %s61, %s62
    %p74 = scmp.eq.s32.totalorder %s15, 6
    %p75 = por %p73, %p74
    %p77 = scmp.ne.s32.totalorder %s62, %s76
    %p78 = scmp.eq.s32.totalorder %s15, 0
    %p79 = por %p77, %p78
    %s80 = ssub.s32 %s9, %s16
    %p81 = scmp.eq.s32.totalorder %s80, 0
    %s83 = sadd.s32 %s82, 1
    %s84 = scalar_select %p81, %s82, %s83
    %p87 = pneg %p81
    %p88 = scmp.eq.s32.totalorder %s9, 6
    %p89 = por %p87, %p88
    %p90 = scmp.ne.s32.totalorder %s82, %s85
    %p91 = scmp.eq.s32.totalorder %s9, 0
    %p92 = por %p90, %p91
    %p93 = scmp.ne.s32.totalorder %s82, %s85
    %p94 = scmp.eq.s32.totalorder %s14, 6
    %p95 = por %p93, %p94
    %p96 = scmp.ne.s32.totalorder %s85, %s86
    %p97 = scmp.eq.s32.totalorder %s14, 0
    %p98 = por %p96, %p97
    %p99 = scmp.ne.s32.totalorder %s85, %s86
    %p100 = scmp.eq.s32.totalorder %s15, 6
    %p101 = por %p99, %p100
    %p103 = scmp.ne.s32.totalorder %s86, %s102
    %p104 = scmp.eq.s32.totalorder %s15, 0
    %p105 = por %p103, %p104
    %p106 = scmp.le.s32.totalorder 1, %s9
    %p107 = scmp.lt.s32.totalorder %s9, 8
    %p108 = pnand %p106, %p107
    %p109 = pneg %p108
    // Predicated region
    $region9: #{forward.3} parent=5 // pred_check
      _
    $region10: #{forward.3} parent=5 // pred_check_branch
      %111 = sbr.rel (%p108) target = $region12
    $region11: #{forward.3} parent=5 // pred_region
      %s112 = ssub.s32 %s9, 1
      // Predicated region
      $region13: #{forward.3} parent=11 // pred_check
        %p113 = pneg %p30
      $region14: #{forward.3} parent=11 // pred_check_branch
        %115 = sbr.rel (%p113) target = $region16
      $region15: #{forward.3} parent=11 // pred_region
        _
      $region16: #{forward.3} parent=11 // pred_fallthru
        _
      // Predicated region
      $region17: #{forward.3} parent=11 // pred_check
        %p116 = pneg %p51
      $region18: #{forward.3} parent=11 // pred_check_branch
        %118 = sbr.rel (%p116) target = $region20
      $region19: #{forward.3} parent=11 // pred_region
        _
      $region20: #{forward.3} parent=11 // pred_fallthru
        _
      // Predicated region
      $region21: #{forward.3} parent=11 // pred_check
        %p119 = pneg %p72
      $region22: #{forward.3} parent=11 // pred_check_branch
        %121 = sbr.rel (%p119) target = $region24
      $region23: #{forward.3} parent=11 // pred_region
        _
      $region24: #{forward.3} parent=11 // pred_fallthru
        _
    $region12: #{forward.3} parent=5 // pred_fallthru
      _
    %p122 = scmp.lt.s32.totalorder %s9, 7
    // Predicated region
    $region25: #{forward.3} parent=5 // pred_check
      %p123 = pneg %p122
    $region26: #{forward.3} parent=5 // pred_check_branch
      %125 = sbr.rel (%p123) target = $region28
    $region27: #{forward.3} parent=5 // pred_region
      _
    $region28: #{forward.3} parent=5 // pred_fallthru
      _
    %p126 = scmp.le.s32.totalorder 1, %s9
    %p127 = scmp.lt.s32.totalorder %s9, 8
    %p128 = pnand %p126, %p127
    %p129 = pneg %p128
    // Predicated region
    $region29: #{forward.3} parent=5 // pred_check
      _
    $region30: #{forward.3} parent=5 // pred_check_branch
      %131 = sbr.rel (%p128) target = $region32
    $region31: #{forward.3} parent=5 // pred_region
      %s132 = ssub.s32 %s9, 1
      %p133 = pneg %p30
      %p134 = pneg %p27
      %p135 = pneg %p51
      %p136 = pneg %p48
      %p137 = pneg %p72
      %p138 = pneg %p69
      %p139 = pneg %p98
      %p140 = pneg %p95
      %s141 = smul.u32 15, %s14
      %p142 = scmp.lt.s32.totalorder %s141, 104
      %s143 = scalar_select %p142, %s141, 104
      %s144 = smul.addr %s143, 4
      %s145 = scalar_lea.vmem %s3, %s144
      %s146 = smul.u32 15, %s14
      %p147 = scmp.lt.s32.totalorder %s146, 104
      %s148 = scalar_select %p147, %s146, 104
      %s149 = smul.addr %s148, 4
      %s150 = scalar_lea.vmem %s3, %s149
      %s151 = smul.u32 15, %s14
      %s153 = smul.u32 %s14, 120
      %s154 = sshra.s32 %s153, 3
      %s155 = sand.u32 %s153, 7
      %s156 = smul.addr %s154, 4
      %s157 = scalar_lea.vmem %s0, %s156
      %v158 = vld [vmem:[%s157] sm:$0xf]
      %v159 = vld [vmem:[%s157 + $0x4] sm:$0xf]
      %v160 = vld [vmem:[%s157 + $0x8] sm:$0xf]
      %v161 = vld [vmem:[%s157 + $0xc] sm:$0xf]
      %v162 = vld [vmem:[%s157 + $0x10] sm:$0xf]
      %v163 = vld [vmem:[%s157 + $0x14] sm:$0xf]
      %v164 = vld [vmem:[%s157 + $0x18] sm:$0xf]
      %v165 = vld [vmem:[%s157 + $0x1c] sm:$0xf]
      %v166 = vld [vmem:[%s157 + $0x20] sm:$0xf]
      %v167 = vld [vmem:[%s157 + $0x24] sm:$0xf]
      %v168 = vld [vmem:[%s157 + $0x28] sm:$0xf]
      %v169 = vld [vmem:[%s157 + $0x2c] sm:$0xf]
      %v170 = vld [vmem:[%s157 + $0x30] sm:$0xf]
      %v171 = vld [vmem:[%s157 + $0x34] sm:$0xf]
      %v172 = vld [vmem:[%s157 + $0x38] sm:$0xf]
      %v173 = vld [vmem:[%s157 + $0x3c] sm:$0xf]
      %v174 = vld [vmem:[%s157 + $0x40] sm:$0xf]
      %v175 = vld [vmem:[%s157 + $0x44] sm:$0xf]
      %v176 = vld [vmem:[%s157 + $0x48] sm:$0xf]
      %v177 = vld [vmem:[%s157 + $0x4c] sm:$0xf]
      %v178 = vld [vmem:[%s157 + $0x50] sm:$0xf]
      %v179 = vld [vmem:[%s157 + $0x54] sm:$0xf]
      %v180 = vld [vmem:[%s157 + $0x58] sm:$0xf]
      %v181 = vld [vmem:[%s157 + $0x5c] sm:$0xf]
      %v182 = vld [vmem:[%s157 + $0x60] sm:$0xf]
      %v183 = vld [vmem:[%s157 + $0x64] sm:$0xf]
      %v184 = vld [vmem:[%s157 + $0x68] sm:$0xf]
      %v200 = vunpack.c.l.b16 %v158
      %v201 = vunpack.c.l.b16 %v159
      %v202 = vunpack.c.l.b16 %v160
      %v203 = vunpack.c.l.b16 %v161
      %v204 = vunpack.c.l.b16 %v162
      %v205 = vunpack.c.l.b16 %v163
      %v206 = vunpack.c.l.b16 %v164
      %v207 = vunpack.c.l.b16 %v165
      %v208 = vunpack.c.l.b16 %v166
      %v209 = vunpack.c.l.b16 %v167
      %v210 = vunpack.c.l.b16 %v168
      %v211 = vunpack.c.l.b16 %v169
      %v212 = vunpack.c.l.b16 %v170
      %v213 = vunpack.c.l.b16 %v171
      %v214 = vunpack.c.l.b16 %v172
      %v215 = vpack.c.b16 %v201, %v200
      %v216 = vpack.c.b16 %v203, %v202
      %v217 = vpack.c.b16 %v205, %v204
      %v218 = vpack.c.b16 %v207, %v206
      %v219 = vpack.c.b16 %v209, %v208
      %v220 = vpack.c.b16 %v211, %v210
      %v221 = vpack.c.b16 %v213, %v212
      %v222 = vpack.c.b16 %v214, %v214
      %v224 = vunpack.c.l.b16 %v173
      %v225 = vpack.c.b16 %v224, %v214
      %vm226 = vsmask.f32 7424
      %v228 = vshrl.u32 %v215, 16
      %v230 = vshll.u32 %v215, 16
      %v232 = vrot.slane %v230, 1
      %v233 = vor.u32 %v228, %v232
      %v235 = vshll.u32 %v216, 16
      %v237 = vrot.slane %v235, 1
      %v238 = vsel %vm226, %v233, %v237
      %v239 = vshrl.u32 %v216, 16
      %v241 = vor.u32 %v239, %v237
      %v243 = vshll.u32 %v217, 16
      %v245 = vrot.slane %v243, 1
      %v246 = vsel %vm226, %v241, %v245
      %v247 = vshrl.u32 %v217, 16
      %v249 = vor.u32 %v247, %v245
      %v251 = vshll.u32 %v218, 16
      %v253 = vrot.slane %v251, 1
      %v254 = vsel %vm226, %v249, %v253
      %v255 = vshrl.u32 %v218, 16
      %v257 = vor.u32 %v255, %v253
      %v259 = vshll.u32 %v219, 16
      %v261 = vrot.slane %v259, 1
      %v262 = vsel %vm226, %v257, %v261
      %v263 = vshrl.u32 %v219, 16
      %v265 = vor.u32 %v263, %v261
      %v267 = vshll.u32 %v220, 16
      %v269 = vrot.slane %v267, 1
      %v270 = vsel %vm226, %v265, %v269
      %v271 = vshrl.u32 %v220, 16
      %v273 = vor.u32 %v271, %v269
      %v275 = vshll.u32 %v221, 16
      %v277 = vrot.slane %v275, 1
      %v278 = vsel %vm226, %v273, %v277
      %v279 = vshrl.u32 %v221, 16
      %v281 = vor.u32 %v279, %v277
      %v283 = vshll.u32 %v225, 16
      %v285 = vrot.slane %v283, 1
      %v286 = vsel %vm226, %v281, %v285
      %v287 = vshrl.u32 %v225, 16
      %v289 = vor.u32 %v287, %v285
      %290 = vrot.lane.b32.xlu0 %v238, 32
      %v291 = vpop.permute.xlu0 %290
      %292 = vrot.lane.b32.xlu0 %v246, 32
      %v293 = vpop.permute.xlu0 %292
      %294 = vrot.lane.b32.xlu0 %v254, 32
      %v295 = vpop.permute.xlu0 %294
      %296 = vrot.lane.b32.xlu0 %v262, 32
      %v297 = vpop.permute.xlu0 %296
      %298 = vrot.lane.b32.xlu0 %v270, 32
      %v299 = vpop.permute.xlu0 %298
      %300 = vrot.lane.b32.xlu0 %v278, 32
      %v301 = vpop.permute.xlu0 %300
      %302 = vrot.lane.b32.xlu0 %v286, 32
      %v303 = vpop.permute.xlu0 %302
      %304 = vrot.lane.b32.xlu0 %v289, 32
      %v305 = vpop.permute.xlu0 %304
      %v307 = vunpack.c.l.b16 %v174
      %v308 = vpack.c.b16 %v202, %v201
      %v309 = vpack.c.b16 %v204, %v203
      %v310 = vpack.c.b16 %v206, %v205
      %v311 = vpack.c.b16 %v208, %v207
      %v312 = vpack.c.b16 %v210, %v209
      %v313 = vpack.c.b16 %v212, %v211
      %v314 = vpack.c.b16 %v214, %v213
      %v315 = vpack.c.b16 %v307, %v224
      %v317 = vshrl.u32 %v308, 16
      %v319 = vshll.u32 %v308, 16
      %v321 = vrot.slane %v319, 1
      %v322 = vor.u32 %v317, %v321
      %v324 = vshll.u32 %v309, 16
      %v326 = vrot.slane %v324, 1
      %v327 = vsel %vm226, %v322, %v326
      %v328 = vshrl.u32 %v309, 16
      %v330 = vor.u32 %v328, %v326
      %v332 = vshll.u32 %v310, 16
      %v334 = vrot.slane %v332, 1
      %v335 = vsel %vm226, %v330, %v334
      %v336 = vshrl.u32 %v310, 16
      %v338 = vor.u32 %v336, %v334
      %v340 = vshll.u32 %v311, 16
      %v342 = vrot.slane %v340, 1
      %v343 = vsel %vm226, %v338, %v342
      %v344 = vshrl.u32 %v311, 16
      %v346 = vor.u32 %v344, %v342
      %v348 = vshll.u32 %v312, 16
      %v350 = vrot.slane %v348, 1
      %v351 = vsel %vm226, %v346, %v350
      %v352 = vshrl.u32 %v312, 16
      %v354 = vor.u32 %v352, %v350
      %v356 = vshll.u32 %v313, 16
      %v358 = vrot.slane %v356, 1
      %v359 = vsel %vm226, %v354, %v358
      %v360 = vshrl.u32 %v313, 16
      %v362 = vor.u32 %v360, %v358
      %v364 = vshll.u32 %v314, 16
      %v366 = vrot.slane %v364, 1
      %v367 = vsel %vm226, %v362, %v366
      %v368 = vshrl.u32 %v314, 16
      %v370 = vor.u32 %v368, %v366
      %v372 = vshll.u32 %v315, 16
      %v374 = vrot.slane %v372, 1
      %v375 = vsel %vm226, %v370, %v374
      %v376 = vshrl.u32 %v315, 16
      %v378 = vor.u32 %v376, %v374
      %379 = vrot.lane.b32.xlu0 %v327, 64
      %v380 = vpop.permute.xlu0 %379
      %381 = vrot.lane.b32.xlu0 %v335, 64
      %v382 = vpop.permute.xlu0 %381
      %383 = vrot.lane.b32.xlu0 %v343, 64
      %v384 = vpop.permute.xlu0 %383
      %385 = vrot.lane.b32.xlu0 %v351, 64
      %v386 = vpop.permute.xlu0 %385
      %387 = vrot.lane.b32.xlu0 %v359, 64
      %v388 = vpop.permute.xlu0 %387
      %389 = vrot.lane.b32.xlu0 %v367, 64
      %v390 = vpop.permute.xlu0 %389
      %391 = vrot.lane.b32.xlu0 %v375, 64
      %v392 = vpop.permute.xlu0 %391
      %393 = vrot.lane.b32.xlu0 %v378, 64
      %v394 = vpop.permute.xlu0 %393
      %vm395 = vcmask 1046528
      %v396 = vrot.slane %v308, 1
      %v397 = vrot.slane %v309, 1
      %v398 = vsel %vm395, %v396, %v397
      %v399 = vrot.slane %v310, 1
      %v400 = vsel %vm395, %v397, %v399
      %v401 = vrot.slane %v311, 1
      %v402 = vsel %vm395, %v399, %v401
      %v403 = vrot.slane %v312, 1
      %v404 = vsel %vm395, %v401, %v403
      %v405 = vrot.slane %v313, 1
      %v406 = vsel %vm395, %v403, %v405
      %v407 = vrot.slane %v314, 1
      %v408 = vsel %vm395, %v405, %v407
      %v409 = vrot.slane %v315, 1
      %v410 = vsel %vm395, %v407, %v409
      %411 = vrot.lane.b32.xlu0 %v398, 96
      %v412 = vpop.permute.xlu0 %411
      %413 = vrot.lane.b32.xlu0 %v400, 96
      %v414 = vpop.permute.xlu0 %413
      %415 = vrot.lane.b32.xlu0 %v402, 96
      %v416 = vpop.permute.xlu0 %415
      %417 = vrot.lane.b32.xlu0 %v404, 96
      %v418 = vpop.permute.xlu0 %417
      %419 = vrot.lane.b32.xlu0 %v406, 96
      %v420 = vpop.permute.xlu0 %419
      %421 = vrot.lane.b32.xlu0 %v408, 96
      %v422 = vpop.permute.xlu0 %421
      %423 = vrot.lane.b32.xlu0 %v410, 96
      %v424 = vpop.permute.xlu0 %423
      %425 = vrot.lane.b32.xlu0 %v409, 96
      %v426 = vpop.permute.xlu0 %425
      %v436 = vunpack.c.l.b16 %v175
      %v437 = vunpack.c.l.b16 %v176
      %v438 = vunpack.c.l.b16 %v177
      %v439 = vunpack.c.l.b16 %v178
      %v440 = vunpack.c.l.b16 %v179
      %v441 = vunpack.c.l.b16 %v180
      %v442 = vunpack.c.l.b16 %v181
      %v443 = vunpack.c.l.b16 %v182
      %v444 = vunpack.c.l.b16 %v183
      %v445 = vpack.c.b16 %v436, %v307
      %v446 = vpack.c.b16 %v438, %v437
      %v447 = vpack.c.b16 %v440, %v439
      %v448 = vpack.c.b16 %v442, %v441
      %v449 = vpack.c.b16 %v444, %v443
      %v451 = vshll.u32 %v445, 16
      %v453 = vrot.slane %v451, 1
      %v454 = vsel %vm226, %v289, %v453
      %v455 = vshrl.u32 %v445, 16
      %v457 = vor.u32 %v455, %v453
      %v459 = vshll.u32 %v446, 16
      %v461 = vrot.slane %v459, 1
      %v462 = vsel %vm226, %v457, %v461
      %v463 = vshrl.u32 %v446, 16
      %v465 = vor.u32 %v463, %v461
      %v467 = vshll.u32 %v447, 16
      %v469 = vrot.slane %v467, 1
      %v470 = vsel %vm226, %v465, %v469
      %v471 = vshrl.u32 %v447, 16
      %v473 = vor.u32 %v471, %v469
      %v475 = vshll.u32 %v448, 16
      %v477 = vrot.slane %v475, 1
      %v478 = vsel %vm226, %v473, %v477
      %v479 = vshrl.u32 %v448, 16
      %v481 = vor.u32 %v479, %v477
      %v483 = vshll.u32 %v449, 16
      %v485 = vrot.slane %v483, 1
      %v486 = vsel %vm226, %v481, %v485
      %v487 = vshrl.u32 %v449, 16
      %v489 = vor.u32 %v487, %v485
      %v490 = vrot.slane %v220, 1
      %v491 = vrot.slane %v221, 1
      %v492 = vsel %vm395, %v490, %v491
      %v493 = vrot.slane %v225, 1
      %v494 = vsel %vm395, %v491, %v493
      %v495 = vrot.slane %v445, 1
      %v496 = vsel %vm395, %v493, %v495
      %v497 = vrot.slane %v446, 1
      %v498 = vsel %vm395, %v495, %v497
      %v499 = vrot.slane %v447, 1
      %v500 = vsel %vm395, %v497, %v499
      %v501 = vrot.slane %v448, 1
      %v502 = vsel %vm395, %v499, %v501
      %v503 = vrot.slane %v449, 1
      %v504 = vsel %vm395, %v501, %v503
      %505 = vrot.lane.b32.xlu0 %v492, 32
      %v506 = vpop.permute.xlu0 %505
      %507 = vrot.lane.b32.xlu0 %v494, 32
      %v508 = vpop.permute.xlu0 %507
      %509 = vrot.lane.b32.xlu0 %v496, 32
      %v510 = vpop.permute.xlu0 %509
      %511 = vrot.lane.b32.xlu0 %v498, 32
      %v512 = vpop.permute.xlu0 %511
      %513 = vrot.lane.b32.xlu0 %v500, 32
      %v514 = vpop.permute.xlu0 %513
      %515 = vrot.lane.b32.xlu0 %v502, 32
      %v516 = vpop.permute.xlu0 %515
      %517 = vrot.lane.b32.xlu0 %v504, 32
      %v518 = vpop.permute.xlu0 %517
      %519 = vrot.lane.b32.xlu0 %v503, 32
      %v520 = vpop.permute.xlu0 %519
      %v522 = vunpack.c.l.b16 %v184
      %v523 = vpack.c.b16 %v437, %v436
      %v524 = vpack.c.b16 %v439, %v438
      %v525 = vpack.c.b16 %v441, %v440
      %v526 = vpack.c.b16 %v443, %v442
      %v527 = vpack.c.b16 %v522, %v444
      %v528 = vrot.slane %v523, 1
      %v529 = vsel %vm395, %v409, %v528
      %v530 = vrot.slane %v524, 1
      %v531 = vsel %vm395, %v528, %v530
      %v532 = vrot.slane %v525, 1
      %v533 = vsel %vm395, %v530, %v532
      %v534 = vrot.slane %v526, 1
      %v535 = vsel %vm395, %v532, %v534
      %v536 = vrot.slane %v527, 1
      %v537 = vsel %vm395, %v534, %v536
      %538 = vrot.lane.b32.xlu0 %v408, 64
      %v539 = vpop.permute.xlu0 %538
      %540 = vrot.lane.b32.xlu0 %v410, 64
      %v541 = vpop.permute.xlu0 %540
      %542 = vrot.lane.b32.xlu0 %v529, 64
      %v543 = vpop.permute.xlu0 %542
      %544 = vrot.lane.b32.xlu0 %v531, 64
      %v545 = vpop.permute.xlu0 %544
      %546 = vrot.lane.b32.xlu0 %v533, 64
      %v547 = vpop.permute.xlu0 %546
      %548 = vrot.lane.b32.xlu0 %v535, 64
      %v549 = vpop.permute.xlu0 %548
      %550 = vrot.lane.b32.xlu0 %v537, 64
      %v551 = vpop.permute.xlu0 %550
      %552 = vrot.lane.b32.xlu0 %v536, 64
      %v553 = vpop.permute.xlu0 %552
      %vm554 = vsmask.f32 6400
      %v555 = vrot.slane %v360, 1
      %v556 = vrot.slane %v356, 2
      %v557 = vor.u32 %v555, %v556
      %v558 = vrot.slane %v368, 1
      %v559 = vrot.slane %v364, 2
      %v560 = vor.u32 %v558, %v559
      %v561 = vsel %vm554, %v557, %v560
      %v562 = vrot.slane %v376, 1
      %v563 = vrot.slane %v372, 2
      %v564 = vor.u32 %v562, %v563
      %v565 = vsel %vm554, %v560, %v564
      %v567 = vshrl.u32 %v523, 16
      %v569 = vrot.slane %v567, 1
      %v570 = vshll.u32 %v523, 16
      %v572 = vrot.slane %v570, 2
      %v573 = vor.u32 %v569, %v572
      %v574 = vsel %vm554, %v564, %v573
      %v576 = vshrl.u32 %v524, 16
      %v578 = vrot.slane %v576, 1
      %v579 = vshll.u32 %v524, 16
      %v581 = vrot.slane %v579, 2
      %v582 = vor.u32 %v578, %v581
      %v583 = vsel %vm554, %v573, %v582
      %v585 = vshrl.u32 %v525, 16
      %v587 = vrot.slane %v585, 1
      %v588 = vshll.u32 %v525, 16
      %v590 = vrot.slane %v588, 2
      %v591 = vor.u32 %v587, %v590
      %v592 = vsel %vm554, %v582, %v591
      %v594 = vshrl.u32 %v526, 16
      %v596 = vrot.slane %v594, 1
      %v597 = vshll.u32 %v526, 16
      %v599 = vrot.slane %v597, 2
      %v600 = vor.u32 %v596, %v599
      %v601 = vsel %vm554, %v591, %v600
      %v603 = vshrl.u32 %v527, 16
      %v605 = vrot.slane %v603, 1
      %v606 = vshll.u32 %v527, 16
      %v608 = vrot.slane %v606, 2
      %v609 = vor.u32 %v605, %v608
      %v610 = vsel %vm554, %v600, %v609
      %611 = vrot.lane.b32.xlu0 %v561, 96
      %v612 = vpop.permute.xlu0 %611
      %613 = vrot.lane.b32.xlu0 %v565, 96
      %v614 = vpop.permute.xlu0 %613
      %615 = vrot.lane.b32.xlu0 %v574, 96
      %v616 = vpop.permute.xlu0 %615
      %617 = vrot.lane.b32.xlu0 %v583, 96
      %v618 = vpop.permute.xlu0 %617
      %619 = vrot.lane.b32.xlu0 %v592, 96
      %v620 = vpop.permute.xlu0 %619
      %621 = vrot.lane.b32.xlu0 %v601, 96
      %v622 = vpop.permute.xlu0 %621
      %623 = vrot.lane.b32.xlu0 %v610, 96
      %v624 = vpop.permute.xlu0 %623
      %625 = vrot.lane.b32.xlu0 %v609, 96
      %v626 = vpop.permute.xlu0 %625
      %vm627 = vcmask 261120
      %v629 = vsel %vm627, %v215, %v291
      %v631 = vsel %vm627, %v216, %v293
      %v633 = vsel %vm627, %v217, %v295
      %v635 = vsel %vm627, %v218, %v297
      %v637 = vsel %vm627, %v219, %v299
      %v639 = vsel %vm627, %v220, %v301
      %v641 = vsel %vm627, %v221, %v303
      %v644 = vsel %vm627, %v222, %v305
      %vm645 = vcmask 523264
      %v647 = vsel %vm645, %v629, %v380
      %v649 = vsel %vm645, %v631, %v382
      %v651 = vsel %vm645, %v633, %v384
      %v653 = vsel %vm645, %v635, %v386
      %v655 = vsel %vm645, %v637, %v388
      %v657 = vsel %vm645, %v639, %v390
      %v659 = vsel %vm645, %v641, %v392
      %v661 = vsel %vm645, %v644, %v394
      %vm662 = vcmask 785408
      %v664 = vsel %vm662, %v647, %v412
      %v667 = vsel %vm662, %v649, %v414
      %v670 = vsel %vm662, %v651, %v416
      %v673 = vsel %vm662, %v653, %v418
      %v676 = vsel %vm662, %v655, %v420
      %v679 = vsel %vm662, %v657, %v422
      %v682 = vsel %vm662, %v659, %v424
      %v685 = vsel %vm662, %v661, %v426
      %v689 = vsel %vm627, %v278, %v506
      %v692 = vsel %vm627, %v286, %v508
      %v695 = vsel %vm627, %v454, %v510
      %v698 = vsel %vm627, %v462, %v512
      %v701 = vsel %vm627, %v470, %v514
      %v704 = vsel %vm627, %v478, %v516
      %v707 = vsel %vm627, %v486, %v518
      %v710 = vsel %vm627, %v489, %v520
      %v712 = vsel %vm645, %v689, %v539
      %v714 = vsel %vm645, %v692, %v541
      %v716 = vsel %vm645, %v695, %v543
      %v718 = vsel %vm645, %v698, %v545
      %v720 = vsel %vm645, %v701, %v547
      %v722 = vsel %vm645, %v704, %v549
      %v724 = vsel %vm645, %v707, %v551
      %v726 = vsel %vm645, %v710, %v553
      %v728 = vsel %vm662, %v712, %v612
      %v731 = vsel %vm662, %v714, %v614
      %v734 = vsel %vm662, %v716, %v616
      %v737 = vsel %vm662, %v718, %v618
      %v740 = vsel %vm662, %v720, %v620
      %v743 = vsel %vm662, %v722, %v622
      %v746 = vsel %vm662, %v724, %v624
      %v749 = vsel %vm662, %v726, %v626
      %v751 = vld [vmem:[%s1] sm:$0xf]
      %v752 = vld [vmem:[%s1 + $0x4] sm:$0xf]
      %v753 = vld [vmem:[%s1 + $0x8] sm:$0xf]
      %v754 = vld [vmem:[%s1 + $0xc] sm:$0xf]
      %v755 = vld [vmem:[%s1 + $0x10] sm:$0xf]
      %v756 = vld [vmem:[%s1 + $0x14] sm:$0xf]
      %v757 = vld [vmem:[%s1 + $0x18] sm:$0xf]
      %v758 = vld [vmem:[%s1 + $0x1c] sm:$0xf]
      %v759 = vld [vmem:[%s1 + $0x20] sm:$0xf]
      %v760 = vld [vmem:[%s1 + $0x24] sm:$0xf]
      %v761 = vld [vmem:[%s1 + $0x28] sm:$0xf]
      %v762 = vld [vmem:[%s1 + $0x2c] sm:$0xf]
      %v763 = vld [vmem:[%s1 + $0x30] sm:$0xf]
      %v764 = vld [vmem:[%s1 + $0x34] sm:$0xf]
      %v765 = vld [vmem:[%s1 + $0x38] sm:$0xf]
      %v766 = vld [vmem:[%s1 + $0x3c] sm:$0xf]
      %v767 = vld [vmem:[%s1 + $0x40] sm:$0xf]
      %v768 = vld [vmem:[%s1 + $0x44] sm:$0xf]
      %v769 = vld [vmem:[%s1 + $0x48] sm:$0xf]
      %v770 = vld [vmem:[%s1 + $0x4c] sm:$0xf]
      %v771 = vld [vmem:[%s1 + $0x50] sm:$0xf]
      %v772 = vld [vmem:[%s1 + $0x54] sm:$0xf]
      %v773 = vld [vmem:[%s1 + $0x58] sm:$0xf]
      %v774 = vld [vmem:[%s1 + $0x5c] sm:$0xf]
      %v775 = vld [vmem:[%s1 + $0x60] sm:$0xf]
      %v776 = vld [vmem:[%s1 + $0x64] sm:$0xf]
      %v777 = vld [vmem:[%s1 + $0x68] sm:$0xf]
      %v778 = vld [vmem:[%s1 + $0x6c] sm:$0xf]
      %v779 = vld [vmem:[%s1 + $0x70] sm:$0xf]
      %v780 = vld [vmem:[%s1 + $0x74] sm:$0xf]
      %v781 = vld [vmem:[%s1 + $0x78] sm:$0xf]
      %v782 = vld [vmem:[%s1 + $0x7c] sm:$0xf]
      %v783 = vld [vmem:[%s2] sm:$0x1]
      %v785 = vlaneseq
      %v786 = vshrl.u32 %v785, 7
      %v787 = vsub.s32 0, %v786
      %v788 = vrot.slane %v783, %v787
      %v822 = vunpack.c.l.b16 %v751
      %v823 = vunpack.c.l.b16 %v752
      %v824 = vunpack.c.l.b16 %v753
      %v825 = vunpack.c.l.b16 %v754
      %v826 = vunpack.c.l.b16 %v755
      %v827 = vunpack.c.l.b16 %v756
      %v828 = vunpack.c.l.b16 %v757
      %v829 = vunpack.c.l.b16 %v758
      %v830 = vunpack.c.l.b16 %v759
      %v831 = vunpack.c.l.b16 %v760
      %v832 = vunpack.c.l.b16 %v761
      %v833 = vunpack.c.l.b16 %v762
      %v834 = vunpack.c.l.b16 %v763
      %v835 = vunpack.c.l.b16 %v764
      %v836 = vunpack.c.l.b16 %v765
      %v837 = vunpack.c.l.b16 %v766
      %v838 = vunpack.c.l.b16 %v767
      %v839 = vunpack.c.l.b16 %v768
      %v840 = vunpack.c.l.b16 %v769
      %v841 = vunpack.c.l.b16 %v770
      %v842 = vunpack.c.l.b16 %v771
      %v843 = vunpack.c.l.b16 %v772
      %v844 = vunpack.c.l.b16 %v773
      %v845 = vunpack.c.l.b16 %v774
      %v846 = vunpack.c.l.b16 %v775
      %v847 = vunpack.c.l.b16 %v776
      %v848 = vunpack.c.l.b16 %v777
      %v849 = vunpack.c.l.b16 %v778
      %v850 = vunpack.c.l.b16 %v779
      %v851 = vunpack.c.l.b16 %v780
      %v852 = vunpack.c.l.b16 %v781
      %v853 = vunpack.c.l.b16 %v782
      %v854 = vpack.c.b16 %v823, %v822
      %v855 = vpack.c.b16 %v825, %v824
      %v856 = vpack.c.b16 %v827, %v826
      %v857 = vpack.c.b16 %v829, %v828
      %v858 = vpack.c.b16 %v831, %v830
      %v859 = vpack.c.b16 %v833, %v832
      %v860 = vpack.c.b16 %v835, %v834
      %v861 = vpack.c.b16 %v837, %v836
      %v862 = vpack.c.b16 %v839, %v838
      %v863 = vpack.c.b16 %v841, %v840
      %v864 = vpack.c.b16 %v843, %v842
      %v865 = vpack.c.b16 %v845, %v844
      %v866 = vpack.c.b16 %v847, %v846
      %v867 = vpack.c.b16 %v849, %v848
      %v868 = vpack.c.b16 %v851, %v850
      %v869 = vpack.c.b16 %v853, %v852
      %886 = vmatprep.subr.bf16.mxu0 0
      %887 = vmatpush1.bf16.msra.mxu0 %v854
      %888 = vmatprep.subr.bf16.mxu0 0
      %889 = vmatpush1.bf16.msra.mxu0 %v855
      %890 = vmatprep.subr.bf16.mxu0 0
      %891 = vmatpush1.bf16.msra.mxu0 %v856
      %892 = vmatprep.subr.bf16.mxu0 0
      %893 = vmatpush1.bf16.msra.mxu0 %v857
      %894 = vmatprep.subr.bf16.mxu0 0
      %895 = vmatpush1.bf16.msra.mxu0 %v858
      %896 = vmatprep.subr.bf16.mxu0 0
      %897 = vmatpush1.bf16.msra.mxu0 %v859
      %898 = vmatprep.subr.bf16.mxu0 0
      %899 = vmatpush1.bf16.msra.mxu0 %v860
      %900 = vmatprep.subr.bf16.mxu0 0
      %901 = vmatpush1.bf16.msra.mxu0 %v861
      %902 = vmatprep.subr.bf16.mxu0 0
      %903 = vmatpush1.bf16.msra.mxu0 %v862
      %904 = vmatprep.subr.bf16.mxu0 0
      %905 = vmatpush1.bf16.msra.mxu0 %v863
      %906 = vmatprep.subr.bf16.mxu0 0
      %907 = vmatpush1.bf16.msra.mxu0 %v864
      %908 = vmatprep.subr.bf16.mxu0 0
      %909 = vmatpush1.bf16.msra.mxu0 %v865
      %910 = vmatprep.subr.bf16.mxu0 0
      %911 = vmatpush1.bf16.msra.mxu0 %v866
      %912 = vmatprep.subr.bf16.mxu0 0
      %913 = vmatpush1.bf16.msra.mxu0 %v867
      %914 = vmatprep.subr.bf16.mxu0 0
      %915 = vmatpush1.bf16.msra.mxu0 %v868
      %916 = vmatprep.subr.bf16.mxu0 0
      %917 = vmatpush1.bf16.msra.mxu0 %v869
      %918 = vmatprep.mubr.bf16.mxu0 %v728
      %919 = vmatmul.mubr.bf16.gmra.mrb[0].mxu0 %v664
      %v920 = vpop.f32.mrb[0].mxu0
      %v921 = vadd.f32 %v788, %v920
      %v922 = vpop.f32.mrb[0].mxu0
      %v923 = vpop.f32.mrb[0].mxu0
      %v924 = vadd.f32 %v788, %v923
      %v925 = vpop.f32.mrb[0].mxu0
      %926 = vmatprep.mubr.bf16.mxu0 %v731
      %927 = vmatmul.mubr.bf16.gmra.mrb[0].mxu0 %v667
      %v928 = vpop.f32.mrb[0].mxu0
      %v929 = vadd.f32 %v788, %v928
      %v930 = vpop.f32.mrb[0].mxu0
      %v931 = vpop.f32.mrb[0].mxu0
      %v932 = vadd.f32 %v788, %v931
      %v933 = vpop.f32.mrb[0].mxu0
      %934 = vmatprep.mubr.bf16.mxu0 %v734
      %935 = vmatmul.mubr.bf16.gmra.mrb[0].mxu0 %v670
      %v936 = vpop.f32.mrb[0].mxu0
      %v937 = vadd.f32 %v788, %v936
      %v938 = vpop.f32.mrb[0].mxu0
      %v939 = vpop.f32.mrb[0].mxu0
      %v940 = vadd.f32 %v788, %v939
      %v941 = vpop.f32.mrb[0].mxu0
      %942 = vmatprep.mubr.bf16.mxu0 %v737
      %943 = vmatmul.mubr.bf16.gmra.mrb[0].mxu0 %v673
      %v944 = vpop.f32.mrb[0].mxu0
      %v945 = vadd.f32 %v788, %v944
      %v946 = vpop.f32.mrb[0].mxu0
      %v947 = vpop.f32.mrb[0].mxu0
      %v948 = vadd.f32 %v788, %v947
      %v949 = vpop.f32.mrb[0].mxu0
      %950 = vmatprep.mubr.bf16.mxu0 %v740
      %951 = vmatmul.mubr.bf16.gmra.mrb[0].mxu0 %v676
      %v952 = vpop.f32.mrb[0].mxu0
      %v953 = vadd.f32 %v788, %v952
      %v954 = vpop.f32.mrb[0].mxu0
      %v955 = vpop.f32.mrb[0].mxu0
      %v956 = vadd.f32 %v788, %v955
      %v957 = vpop.f32.mrb[0].mxu0
      %958 = vmatprep.mubr.bf16.mxu0 %v743
      %959 = vmatmul.mubr.bf16.gmra.mrb[0].mxu0 %v679
      %v960 = vpop.f32.mrb[0].mxu0
      %v961 = vadd.f32 %v788, %v960
      %v962 = vpop.f32.mrb[0].mxu0
      %v963 = vpop.f32.mrb[0].mxu0
      %v964 = vadd.f32 %v788, %v963
      %v965 = vpop.f32.mrb[0].mxu0
      %966 = vmatprep.mubr.bf16.mxu0 %v746
      %967 = vmatmul.mubr.bf16.gmra.mrb[0].mxu0 %v682
      %v968 = vpop.f32.mrb[0].mxu0
      %v969 = vadd.f32 %v788, %v968
      %v970 = vpop.f32.mrb[0].mxu0
      %v971 = vpop.f32.mrb[0].mxu0
      %v972 = vadd.f32 %v788, %v971
      %v973 = vpop.f32.mrb[0].mxu0
      %974 = vmatprep.mubr.bf16.mxu0 %v749
      %975 = vmatmul.mubr.bf16.gmra.mrb[0].mxu0 %v685
      %v976 = vpop.f32.mrb[0].mxu0
      %v977 = vadd.f32 %v788, %v976
      %v978 = vpop.f32.mrb[0].mxu0
      %v979 = vpop.f32.mrb[0].mxu0
      %v980 = vpop.f32.mrb[0].mxu0
      %981 = vdwg.mxu0
      %v982 = vmax.f32 %v921, 0.0
      %v983 = vmax.f32 %v924, 0.0
      %v984 = vmax.f32 %v929, 0.0
      %v985 = vmax.f32 %v932, 0.0
      %v986 = vmax.f32 %v937, 0.0
      %v987 = vmax.f32 %v940, 0.0
      %v988 = vmax.f32 %v945, 0.0
      %v989 = vmax.f32 %v948, 0.0
      %v990 = vmax.f32 %v953, 0.0
      %v991 = vmax.f32 %v956, 0.0
      %v992 = vmax.f32 %v961, 0.0
      %v993 = vmax.f32 %v964, 0.0
      %v994 = vmax.f32 %v969, 0.0
      %v995 = vmax.f32 %v972, 0.0
      %v996 = vmax.f32 %v977, 0.0
      %v997 = vpack.c.bf16 %v983, %v982
      %v998 = vpack.c.bf16 %v985, %v984
      %v999 = vpack.c.bf16 %v987, %v986
      %v1000 = vpack.c.bf16 %v989, %v988
      %v1001 = vpack.c.bf16 %v991, %v990
      %v1002 = vpack.c.bf16 %v993, %v992
      %v1003 = vpack.c.bf16 %v995, %v994
      %v1004 = vpack.c.bf16 %v996, %v996
      %v1013 = vunpack.c.l.b16 %v997
      %v1014 = vunpack.c.h.b16 %v997
      %v1015 = vunpack.c.l.b16 %v998
      %v1016 = vunpack.c.h.b16 %v998
      %v1017 = vunpack.c.l.b16 %v999
      %v1018 = vunpack.c.h.b16 %v999
      %v1019 = vunpack.c.l.b16 %v1000
      %v1020 = vunpack.c.h.b16 %v1000
      %v1021 = vunpack.c.l.b16 %v1001
      %v1022 = vunpack.c.h.b16 %v1001
      %v1023 = vunpack.c.l.b16 %v1002
      %v1024 = vunpack.c.h.b16 %v1002
      %v1025 = vunpack.c.l.b16 %v1003
      %v1026 = vunpack.c.h.b16 %v1003
      %v1027 = vunpack.c.l.b16 %v1004
      %v1028 = vpack.c.b16 %v1013, %v1013
      %v1029 = vpack.c.b16 %v1014, %v1014
      %v1030 = vpack.c.b16 %v1015, %v1015
      %v1031 = vpack.c.b16 %v1016, %v1016
      %v1032 = vpack.c.b16 %v1017, %v1017
      %v1033 = vpack.c.b16 %v1018, %v1018
      %v1034 = vpack.c.b16 %v1019, %v1019
      %v1035 = vpack.c.b16 %v1020, %v1020
      %v1036 = vpack.c.b16 %v1021, %v1021
      %v1037 = vpack.c.b16 %v1022, %v1022
      %v1038 = vpack.c.b16 %v1023, %v1023
      %v1039 = vpack.c.b16 %v1024, %v1024
      %v1040 = vpack.c.b16 %v1025, %v1025
      %v1041 = vpack.c.b16 %v1026, %v1026
      %v1042 = vpack.c.b16 %v1027, %v1027
      %1058 = vst [vmem:[%s150] sm:$0xf] %v1028
      %1059 = vst [vmem:[%s150 + $0x4] sm:$0xf] %v1029
      %1060 = vst [vmem:[%s150 + $0x8] sm:$0xf] %v1030
      %1061 = vst [vmem:[%s150 + $0xc] sm:$0xf] %v1031
      %1062 = vst [vmem:[%s150 + $0x10] sm:$0xf] %v1032
      %1063 = vst [vmem:[%s150 + $0x14] sm:$0xf] %v1033
      %1064 = vst [vmem:[%s150 + $0x18] sm:$0xf] %v1034
      %1065 = vst [vmem:[%s150 + $0x1c] sm:$0xf] %v1035
      %1066 = vst [vmem:[%s150 + $0x20] sm:$0xf] %v1036
      %1067 = vst [vmem:[%s150 + $0x24] sm:$0xf] %v1037
      %1068 = vst [vmem:[%s150 + $0x28] sm:$0xf] %v1038
      %1069 = vst [vmem:[%s150 + $0x2c] sm:$0xf] %v1039
      %1070 = vst [vmem:[%s150 + $0x30] sm:$0xf] %v1040
      %1071 = vst [vmem:[%s150 + $0x34] sm:$0xf] %v1041
      %1072 = vst [vmem:[%s150 + $0x38] sm:$0xf] %v1042
      %s1073 = smul.u32 15, %s14
      %p1074 = scmp.lt.s32.totalorder %s1073, 104
      %s1075 = scalar_select %p1074, %s1073, 104
      %s1076 = smul.addr %s1075, 4
      %s1077 = scalar_lea.vmem %s3, %s1076
      // Predicated region
      $region33: #{forward.3} parent=31 // pred_check
        %p1078 = pneg %p95
      $region34: #{forward.3} parent=31 // pred_check_branch
        %1080 = sbr.rel (%p1078) target = $region36
      $region35: #{forward.3} parent=31 // pred_region
        %s1081 = smul.u32 15, %s14
      $region36: #{forward.3} parent=31 // pred_fallthru
        _
    $region32: #{forward.3} parent=5 // pred_fallthru
      _
    %p1082 = scmp.le.s32.totalorder 2, %s9
    // Predicated region
    $region37: #{forward.3} parent=5 // pred_check
      %p1083 = pneg %p1082
    $region38: #{forward.3} parent=5 // pred_check_branch
      %1085 = sbr.rel (%p1083) target = $region40
    $region39: #{forward.3} parent=5 // pred_region
      %s1086 = ssub.s32 %s9, 2
      // Predicated region
      $region41: #{forward.3} parent=39 // pred_check
        %p1087 = pneg %p101
      $region42: #{forward.3} parent=39 // pred_check_branch
        %1089 = sbr.rel (%p1087) target = $region44
      $region43: #{forward.3} parent=39 // pred_region
        %s1090 = smul.u32 15, %s15
        %p1091 = scmp.lt.s32.totalorder %s1090, 104
        %s1092 = scalar_select %p1091, %s1090, 104
        %s1093 = smul.addr %s1092, 4
        %s1094 = scalar_lea.vmem %s3, %s1093
      $region44: #{forward.3} parent=39 // pred_fallthru
        _
    $region40: #{forward.3} parent=5 // pred_fallthru
      _
  $region6: #{forward.3} parent=0 // loop_footer
    %s13 = sadd.s32 1, %s9
  $region7: #{forward.3} parent=0 // loop_footer_branch
    %8 = sbr.rel target = $region3
  $region8: #{forward.3} parent=0 // loop_exit
    _

// kernel: forward.4
$region0: #{forward.4}
  #allocation0 [shape = 'u32[]', space=smem, size = 0x4, offset = 0x4, fixed_abs, tag = 'smem constant byte address 0x4 - core index']
  #allocation1 [shape = 'u32[144,128]{1,0:T(1,128)}', space=vmem, size = 0x12000, scoped, tag = 'internal scratch']
  %s0 = inlined_call_operand.vmem [shape: bf16[192,64], index: 0, kind: input, shape index: {}]
  %s1 = inlined_call_operand.vmem [shape: bf16[512,128], index: 1, kind: input, shape index: {}]
  %s2 = inlined_call_operand.vmem [shape: f32[1,128], index: 2, kind: input, shape index: {}]
  %s3 = inlined_call_operand.vmem [shape: bf16[160,128], index: 3, kind: output, shape index: {}]
  %s4 = sld [smem:[#allocation0]]
  $region45: #{forward.4} parent=0
    _
  %s6 = ssub.s32 1, %s4
  %s7 = scalar_select 0, %s6, %s4
  loop: start=0, step=1, limit=4
  $region2: #{forward.4} parent=0 // loop_pre_header
    _
  $region3: #{forward.4} parent=0 // loop_header
    %s9 = sphi 0, %s13
    %p10 = scmp.ge.s32.totalorder %s9, 4
    %s17 = sphi 0, %s17
    %s19 = sphi 0, %s17
    %s20 = sphi 0, %s19
    %s34 = sphi 0, %s20
    %s38 = sphi 0, %s38
    %s40 = sphi 0, %s38
    %s41 = sphi 0, %s40
    %s55 = sphi 0, %s41
    %s59 = sphi 0, %s59
    %s61 = sphi 0, %s59
    %s62 = sphi 0, %s61
    %s76 = sphi 0, %s62
    %s82 = sphi 0, %s84
    %s85 = sphi 0, %s82
    %s86 = sphi 0, %s85
    %s102 = sphi 0, %s86
  $region4: #{forward.4} parent=0 // loop_header_branch
    %12 = sbr.rel (%p10) target = $region8
  $region5: #{forward.4} parent=0 // loop_body
    %s14 = ssub.s32 %s9, 1
    %s15 = ssub.s32 %s9, 2
    %s16 = sadd.s32 %s9, 1
    %s18 = sadd.s32 %s17, 1
    %p21 = scmp.eq.s32.totalorder %s9, 1
    %p22 = scmp.ne.s32.totalorder %s17, %s19
    %p23 = scmp.eq.s32.totalorder %s9, 0
    %p24 = por %p22, %p23
    %p25 = scmp.ne.s32.totalorder %s17, %s19
    %p26 = scmp.eq.s32.totalorder %s14, 1
    %p27 = por %p25, %p26
    %p28 = scmp.ne.s32.totalorder %s19, %s20
    %p29 = scmp.eq.s32.totalorder %s14, 0
    %p30 = por %p28, %p29
    %p31 = scmp.ne.s32.totalorder %s19, %s20
    %p32 = scmp.eq.s32.totalorder %s15, 1
    %p33 = por %p31, %p32
    %p35 = scmp.ne.s32.totalorder %s20, %s34
    %p36 = scmp.eq.s32.totalorder %s15, 0
    %p37 = por %p35, %p36
    %s39 = sadd.s32 %s38, 1
    %p42 = scmp.eq.s32.totalorder %s9, 1
    %p43 = scmp.ne.s32.totalorder %s38, %s40
    %p44 = scmp.eq.s32.totalorder %s9, 0
    %p45 = por %p43, %p44
    %p46 = scmp.ne.s32.totalorder %s38, %s40
    %p47 = scmp.eq.s32.totalorder %s14, 1
    %p48 = por %p46, %p47
    %p49 = scmp.ne.s32.totalorder %s40, %s41
    %p50 = scmp.eq.s32.totalorder %s14, 0
    %p51 = por %p49, %p50
    %p52 = scmp.ne.s32.totalorder %s40, %s41
    %p53 = scmp.eq.s32.totalorder %s15, 1
    %p54 = por %p52, %p53
    %p56 = scmp.ne.s32.totalorder %s41, %s55
    %p57 = scmp.eq.s32.totalorder %s15, 0
    %p58 = por %p56, %p57
    %s60 = sadd.s32 %s59, 1
    %p63 = scmp.eq.s32.totalorder %s9, 1
    %p64 = scmp.ne.s32.totalorder %s59, %s61
    %p65 = scmp.eq.s32.totalorder %s9, 0
    %p66 = por %p64, %p65
    %p67 = scmp.ne.s32.totalorder %s59, %s61
    %p68 = scmp.eq.s32.totalorder %s14, 1
    %p69 = por %p67, %p68
    %p70 = scmp.ne.s32.totalorder %s61, %s62
    %p71 = scmp.eq.s32.totalorder %s14, 0
    %p72 = por %p70, %p71
    %p73 = scmp.ne.s32.totalorder %s61, %s62
    %p74 = scmp.eq.s32.totalorder %s15, 1
    %p75 = por %p73, %p74
    %p77 = scmp.ne.s32.totalorder %s62, %s76
    %p78 = scmp.eq.s32.totalorder %s15, 0
    %p79 = por %p77, %p78
    %s80 = ssub.s32 %s9, %s16
    %p81 = scmp.eq.s32.totalorder %s80, 0
    %s83 = sadd.s32 %s82, 1
    %s84 = scalar_select %p81, %s82, %s83
    %p87 = pneg %p81
    %p88 = scmp.eq.s32.totalorder %s9, 1
    %p89 = por %p87, %p88
    %p90 = scmp.ne.s32.totalorder %s82, %s85
    %p91 = scmp.eq.s32.totalorder %s9, 0
    %p92 = por %p90, %p91
    %p93 = scmp.ne.s32.totalorder %s82, %s85
    %p94 = scmp.eq.s32.totalorder %s14, 1
    %p95 = por %p93, %p94
    %p96 = scmp.ne.s32.totalorder %s85, %s86
    %p97 = scmp.eq.s32.totalorder %s14, 0
    %p98 = por %p96, %p97
    %p99 = scmp.ne.s32.totalorder %s85, %s86
    %p100 = scmp.eq.s32.totalorder %s15, 1
    %p101 = por %p99, %p100
    %p103 = scmp.ne.s32.totalorder %s86, %s102
    %p104 = scmp.eq.s32.totalorder %s15, 0
    %p105 = por %p103, %p104
    %p106 = scmp.le.s32.totalorder 1, %s9
    %p107 = scmp.lt.s32.totalorder %s9, 3
    %p108 = pnand %p106, %p107
    %p109 = pneg %p108
    // Predicated region
    $region9: #{forward.4} parent=5 // pred_check
      _
    $region10: #{forward.4} parent=5 // pred_check_branch
      %111 = sbr.rel (%p108) target = $region12
    $region11: #{forward.4} parent=5 // pred_region
      %s112 = ssub.s32 %s9, 1
      // Predicated region
      $region13: #{forward.4} parent=11 // pred_check
        %p113 = pneg %p30
      $region14: #{forward.4} parent=11 // pred_check_branch
        %115 = sbr.rel (%p113) target = $region16
      $region15: #{forward.4} parent=11 // pred_region
        _
      $region16: #{forward.4} parent=11 // pred_fallthru
        _
      // Predicated region
      $region17: #{forward.4} parent=11 // pred_check
        %p116 = pneg %p51
      $region18: #{forward.4} parent=11 // pred_check_branch
        %118 = sbr.rel (%p116) target = $region20
      $region19: #{forward.4} parent=11 // pred_region
        _
      $region20: #{forward.4} parent=11 // pred_fallthru
        _
      // Predicated region
      $region21: #{forward.4} parent=11 // pred_check
        %p119 = pneg %p72
      $region22: #{forward.4} parent=11 // pred_check_branch
        %121 = sbr.rel (%p119) target = $region24
      $region23: #{forward.4} parent=11 // pred_region
        _
      $region24: #{forward.4} parent=11 // pred_fallthru
        _
    $region12: #{forward.4} parent=5 // pred_fallthru
      _
    %p122 = scmp.lt.s32.totalorder %s9, 2
    // Predicated region
    $region25: #{forward.4} parent=5 // pred_check
      %p123 = pneg %p122
    $region26: #{forward.4} parent=5 // pred_check_branch
      %125 = sbr.rel (%p123) target = $region28
    $region27: #{forward.4} parent=5 // pred_region
      _
    $region28: #{forward.4} parent=5 // pred_fallthru
      _
    %p126 = scmp.le.s32.totalorder 1, %s9
    %p127 = scmp.lt.s32.totalorder %s9, 3
    %p128 = pnand %p126, %p127
    %p129 = pneg %p128
    // Predicated region
    $region29: #{forward.4} parent=5 // pred_check
      _
    $region30: #{forward.4} parent=5 // pred_check_branch
      %131 = sbr.rel (%p128) target = $region32
    $region31: #{forward.4} parent=5 // pred_region
      %s132 = ssub.s32 %s9, 1
      %p133 = pneg %p30
      %p134 = pneg %p27
      %p135 = pneg %p51
      %p136 = pneg %p48
      %p137 = pneg %p72
      %p138 = pneg %p69
      %p139 = pneg %p98
      %p140 = pneg %p95
      %s141 = smul.u32 10, %s14
      %p142 = scmp.lt.s32.totalorder %s141, 19
      %s143 = scalar_select %p142, %s141, 19
      %s144 = smul.addr %s143, 4
      %s145 = scalar_lea.vmem %s3, %s144
      %s146 = smul.u32 10, %s14
      %p147 = scmp.lt.s32.totalorder %s146, 19
      %s148 = scalar_select %p147, %s146, 19
      %s149 = smul.addr %s148, 4
      %s150 = scalar_lea.vmem %s3, %s149
      %s151 = smul.u32 10, %s14
      %s153 = smul.u32 %s14, 80
      %s154 = sshra.s32 %s153, 3
      %s155 = sand.u32 %s153, 7
      %s156 = smul.addr %s154, 4
      %s157 = scalar_lea.vmem %s0, %s156
      %v158 = vld [vmem:[%s157] sm:$0xf]
      %v159 = vld [vmem:[%s157 + $0x4] sm:$0xf]
      %v160 = vld [vmem:[%s157 + $0x8] sm:$0xf]
      %v161 = vld [vmem:[%s157 + $0xc] sm:$0xf]
      %v162 = vld [vmem:[%s157 + $0x10] sm:$0xf]
      %v163 = vld [vmem:[%s157 + $0x14] sm:$0xf]
      %v164 = vld [vmem:[%s157 + $0x18] sm:$0xf]
      %v165 = vld [vmem:[%s157 + $0x1c] sm:$0xf]
      %v166 = vld [vmem:[%s157 + $0x20] sm:$0xf]
      %v167 = vld [vmem:[%s157 + $0x24] sm:$0xf]
      %v168 = vld [vmem:[%s157 + $0x28] sm:$0xf]
      %v169 = vld [vmem:[%s157 + $0x2c] sm:$0xf]
      %v170 = vld [vmem:[%s157 + $0x30] sm:$0xf]
      %v171 = vld [vmem:[%s157 + $0x34] sm:$0xf]
      %v182 = vunpack.c.l.b16 %v158
      %v183 = vunpack.c.l.b16 %v159
      %v184 = vunpack.c.l.b16 %v160
      %v185 = vunpack.c.l.b16 %v161
      %v186 = vunpack.c.l.b16 %v162
      %v187 = vunpack.c.l.b16 %v163
      %v188 = vunpack.c.l.b16 %v164
      %v189 = vunpack.c.l.b16 %v165
      %v190 = vunpack.c.l.b16 %v166
      %v191 = vunpack.c.l.b16 %v167
      %v192 = vpack.c.b16 %v183, %v182
      %v193 = vpack.c.b16 %v185, %v184
      %v194 = vpack.c.b16 %v187, %v186
      %v195 = vpack.c.b16 %v189, %v188
      %v196 = vpack.c.b16 %v191, %v190
      %v198 = vunpack.c.l.b16 %v168
      %v199 = vpack.c.b16 %v198, %v198
      %vm200 = vsmask.f32 7424
      %v202 = vshrl.u32 %v192, 16
      %v204 = vshll.u32 %v192, 16
      %v206 = vrot.slane %v204, 1
      %v207 = vor.u32 %v202, %v206
      %v209 = vshll.u32 %v193, 16
      %v211 = vrot.slane %v209, 1
      %v212 = vsel %vm200, %v207, %v211
      %v213 = vshrl.u32 %v193, 16
      %v215 = vor.u32 %v213, %v211
      %v217 = vshll.u32 %v194, 16
      %v219 = vrot.slane %v217, 1
      %v220 = vsel %vm200, %v215, %v219
      %v221 = vshrl.u32 %v194, 16
      %v223 = vor.u32 %v221, %v219
      %v225 = vshll.u32 %v195, 16
      %v227 = vrot.slane %v225, 1
      %v228 = vsel %vm200, %v223, %v227
      %v229 = vshrl.u32 %v195, 16
      %v231 = vor.u32 %v229, %v227
      %v233 = vshll.u32 %v196, 16
      %v235 = vrot.slane %v233, 1
      %v236 = vsel %vm200, %v231, %v235
      %v237 = vshrl.u32 %v196, 16
      %v239 = vor.u32 %v237, %v235
      %v241 = vshll.u32 %v199, 16
      %v243 = vrot.slane %v241, 1
      %v244 = vsel %vm200, %v239, %v243
      %245 = vrot.lane.b32.xlu0 %v212, 64
      %v246 = vpop.permute.xlu0 %245
      %247 = vrot.lane.b32.xlu0 %v220, 64
      %v248 = vpop.permute.xlu0 %247
      %249 = vrot.lane.b32.xlu0 %v228, 64
      %v250 = vpop.permute.xlu0 %249
      %251 = vrot.lane.b32.xlu0 %v236, 64
      %v252 = vpop.permute.xlu0 %251
      %253 = vrot.lane.b32.xlu0 %v244, 64
      %v254 = vpop.permute.xlu0 %253
      %vm255 = vsmask.f32 5376
      %v256 = vrot.slane %v202, 2
      %v257 = vrot.slane %v204, 3
      %v258 = vor.u32 %v256, %v257
      %v259 = vrot.slane %v213, 2
      %v260 = vrot.slane %v209, 3
      %v261 = vor.u32 %v259, %v260
      %v262 = vsel %vm255, %v258, %v261
      %v263 = vrot.slane %v221, 2
      %v264 = vrot.slane %v217, 3
      %v265 = vor.u32 %v263, %v264
      %v266 = vsel %vm255, %v261, %v265
      %v267 = vrot.slane %v229, 2
      %v268 = vrot.slane %v225, 3
      %v269 = vor.u32 %v267, %v268
      %v270 = vsel %vm255, %v265, %v269
      %v271 = vrot.slane %v237, 2
      %v272 = vrot.slane %v233, 3
      %v273 = vor.u32 %v271, %v272
      %v274 = vsel %vm255, %v269, %v273
      %v275 = vshrl.u32 %v199, 16
      %v277 = vrot.slane %v275, 2
      %v278 = vrot.slane %v241, 3
      %v279 = vor.u32 %v277, %v278
      %v280 = vsel %vm255, %v273, %v279
      %vm281 = vcmask 1044480
      %v282 = vrot.slane %v192, 3
      %v283 = vrot.slane %v193, 3
      %v284 = vsel %vm281, %v282, %v283
      %v285 = vrot.slane %v194, 3
      %v286 = vsel %vm281, %v283, %v285
      %v287 = vrot.slane %v195, 3
      %v288 = vsel %vm281, %v285, %v287
      %v289 = vrot.slane %v196, 3
      %v290 = vsel %vm281, %v287, %v289
      %v291 = vrot.slane %v199, 3
      %v292 = vsel %vm281, %v289, %v291
      %293 = vrot.lane.b32.xlu0 %v284, 64
      %v294 = vpop.permute.xlu0 %293
      %295 = vrot.lane.b32.xlu0 %v286, 64
      %v296 = vpop.permute.xlu0 %295
      %297 = vrot.lane.b32.xlu0 %v288, 64
      %v298 = vpop.permute.xlu0 %297
      %299 = vrot.lane.b32.xlu0 %v290, 64
      %v300 = vpop.permute.xlu0 %299
      %301 = vrot.lane.b32.xlu0 %v292, 64
      %v302 = vpop.permute.xlu0 %301
      %v306 = vunpack.c.l.b16 %v169
      %v307 = vunpack.c.l.b16 %v170
      %v308 = vunpack.c.l.b16 %v171
      %v309 = vpack.c.b16 %v186, %v185
      %v310 = vpack.c.b16 %v188, %v187
      %v311 = vpack.c.b16 %v190, %v189
      %v312 = vpack.c.b16 %v198, %v191
      %v313 = vpack.c.b16 %v307, %v306
      %v314 = vpack.c.b16 %v308, %v308
      %v316 = vshrl.u32 %v309, 16
      %v318 = vshll.u32 %v309, 16
      %v320 = vrot.slane %v318, 1
      %v321 = vor.u32 %v316, %v320
      %v323 = vshll.u32 %v310, 16
      %v325 = vrot.slane %v323, 1
      %v326 = vsel %vm200, %v321, %v325
      %v327 = vshrl.u32 %v310, 16
      %v329 = vor.u32 %v327, %v325
      %v331 = vshll.u32 %v311, 16
      %v333 = vrot.slane %v331, 1
      %v334 = vsel %vm200, %v329, %v333
      %v335 = vshrl.u32 %v311, 16
      %v337 = vor.u32 %v335, %v333
      %v339 = vshll.u32 %v312, 16
      %v341 = vrot.slane %v339, 1
      %v342 = vsel %vm200, %v337, %v341
      %v343 = vshrl.u32 %v312, 16
      %v345 = vor.u32 %v343, %v341
      %v347 = vshll.u32 %v313, 16
      %v349 = vrot.slane %v347, 1
      %v350 = vsel %vm200, %v345, %v349
      %v351 = vshrl.u32 %v313, 16
      %v353 = vor.u32 %v351, %v349
      %v355 = vshll.u32 %v314, 16
      %v357 = vrot.slane %v355, 1
      %v358 = vsel %vm200, %v353, %v357
      %vm359 = vcmask 1046528
      %v360 = vrot.slane %v309, 1
      %v361 = vrot.slane %v310, 1
      %v362 = vsel %vm359, %v360, %v361
      %v363 = vrot.slane %v311, 1
      %v364 = vsel %vm359, %v361, %v363
      %v365 = vrot.slane %v312, 1
      %v366 = vsel %vm359, %v363, %v365
      %v367 = vrot.slane %v313, 1
      %v368 = vsel %vm359, %v365, %v367
      %v369 = vrot.slane %v314, 1
      %v370 = vsel %vm359, %v367, %v369
      %371 = vrot.lane.b32.xlu0 %v362, 64
      %v372 = vpop.permute.xlu0 %371
      %373 = vrot.lane.b32.xlu0 %v364, 64
      %v374 = vpop.permute.xlu0 %373
      %375 = vrot.lane.b32.xlu0 %v366, 64
      %v376 = vpop.permute.xlu0 %375
      %377 = vrot.lane.b32.xlu0 %v368, 64
      %v378 = vpop.permute.xlu0 %377
      %379 = vrot.lane.b32.xlu0 %v370, 64
      %v380 = vpop.permute.xlu0 %379
      %v381 = vrot.slane %v309, 3
      %v382 = vrot.slane %v310, 3
      %v383 = vsel %vm281, %v381, %v382
      %v384 = vrot.slane %v311, 3
      %v385 = vsel %vm281, %v382, %v384
      %v386 = vrot.slane %v312, 3
      %v387 = vsel %vm281, %v384, %v386
      %v388 = vrot.slane %v313, 3
      %v389 = vsel %vm281, %v386, %v388
      %v390 = vrot.slane %v314, 3
      %v391 = vsel %vm281, %v388, %v390
      %vm392 = vsmask.f32 4352
      %v393 = vrot.slane %v316, 3
      %v394 = vrot.slane %v318, 4
      %v395 = vor.u32 %v393, %v394
      %v396 = vrot.slane %v327, 3
      %v397 = vrot.slane %v323, 4
      %v398 = vor.u32 %v396, %v397
      %v399 = vsel %vm392, %v395, %v398
      %v400 = vrot.slane %v335, 3
      %v401 = vrot.slane %v331, 4
      %v402 = vor.u32 %v400, %v401
      %v403 = vsel %vm392, %v398, %v402
      %v404 = vrot.slane %v343, 3
      %v405 = vrot.slane %v339, 4
      %v406 = vor.u32 %v404, %v405
      %v407 = vsel %vm392, %v402, %v406
      %v408 = vrot.slane %v351, 3
      %v409 = vrot.slane %v347, 4
      %v410 = vor.u32 %v408, %v409
      %v411 = vsel %vm392, %v406, %v410
      %v412 = vshrl.u32 %v314, 16
      %v414 = vrot.slane %v412, 3
      %v415 = vrot.slane %v355, 4
      %v416 = vor.u32 %v414, %v415
      %v417 = vsel %vm392, %v410, %v416
      %418 = vrot.lane.b32.xlu0 %v399, 64
      %v419 = vpop.permute.xlu0 %418
      %420 = vrot.lane.b32.xlu0 %v403, 64
      %v421 = vpop.permute.xlu0 %420
      %422 = vrot.lane.b32.xlu0 %v407, 64
      %v423 = vpop.permute.xlu0 %422
      %424 = vrot.lane.b32.xlu0 %v411, 64
      %v425 = vpop.permute.xlu0 %424
      %426 = vrot.lane.b32.xlu0 %v417, 64
      %v427 = vpop.permute.xlu0 %426
      %vm428 = vcmask 523264
      %v430 = vsel %vm428, %v192, %v246
      %v433 = vsel %vm428, %v193, %v248
      %v436 = vsel %vm428, %v194, %v250
      %v439 = vsel %vm428, %v195, %v252
      %v442 = vsel %vm428, %v196, %v254
      %v446 = vsel %vm428, %v262, %v294
      %v450 = vsel %vm428, %v266, %v296
      %v454 = vsel %vm428, %v270, %v298
      %v458 = vsel %vm428, %v274, %v300
      %v462 = vsel %vm428, %v280, %v302
      %v466 = vsel %vm428, %v326, %v372
      %v470 = vsel %vm428, %v334, %v374
      %v474 = vsel %vm428, %v342, %v376
      %v478 = vsel %vm428, %v350, %v378
      %v482 = vsel %vm428, %v358, %v380
      %v486 = vsel %vm428, %v383, %v419
      %v490 = vsel %vm428, %v385, %v421
      %v494 = vsel %vm428, %v387, %v423
      %v498 = vsel %vm428, %v389, %v425
      %v502 = vsel %vm428, %v391, %v427
      %v504 = vld [vmem:[%s1] sm:$0xf]
      %v505 = vld [vmem:[%s1 + $0x4] sm:$0xf]
      %v506 = vld [vmem:[%s1 + $0x8] sm:$0xf]
      %v507 = vld [vmem:[%s1 + $0xc] sm:$0xf]
      %v508 = vld [vmem:[%s1 + $0x10] sm:$0xf]
      %v509 = vld [vmem:[%s1 + $0x14] sm:$0xf]
      %v510 = vld [vmem:[%s1 + $0x18] sm:$0xf]
      %v511 = vld [vmem:[%s1 + $0x1c] sm:$0xf]
      %v512 = vld [vmem:[%s1 + $0x20] sm:$0xf]
      %v513 = vld [vmem:[%s1 + $0x24] sm:$0xf]
      %v514 = vld [vmem:[%s1 + $0x28] sm:$0xf]
      %v515 = vld [vmem:[%s1 + $0x2c] sm:$0xf]
      %v516 = vld [vmem:[%s1 + $0x30] sm:$0xf]
      %v517 = vld [vmem:[%s1 + $0x34] sm:$0xf]
      %v518 = vld [vmem:[%s1 + $0x38] sm:$0xf]
      %v519 = vld [vmem:[%s1 + $0x3c] sm:$0xf]
      %v520 = vld [vmem:[%s1 + $0x40] sm:$0xf]
      %v521 = vld [vmem:[%s1 + $0x44] sm:$0xf]
      %v522 = vld [vmem:[%s1 + $0x48] sm:$0xf]
      %v523 = vld [vmem:[%s1 + $0x4c] sm:$0xf]
      %v524 = vld [vmem:[%s1 + $0x50] sm:$0xf]
      %v525 = vld [vmem:[%s1 + $0x54] sm:$0xf]
      %v526 = vld [vmem:[%s1 + $0x58] sm:$0xf]
      %v527 = vld [vmem:[%s1 + $0x5c] sm:$0xf]
      %v528 = vld [vmem:[%s1 + $0x60] sm:$0xf]
      %v529 = vld [vmem:[%s1 + $0x64] sm:$0xf]
      %v530 = vld [vmem:[%s1 + $0x68] sm:$0xf]
      %v531 = vld [vmem:[%s1 + $0x6c] sm:$0xf]
      %v532 = vld [vmem:[%s1 + $0x70] sm:$0xf]
      %v533 = vld [vmem:[%s1 + $0x74] sm:$0xf]
      %v534 = vld [vmem:[%s1 + $0x78] sm:$0xf]
      %v535 = vld [vmem:[%s1 + $0x7c] sm:$0xf]
      %v536 = vld [vmem:[%s1 + $0x80] sm:$0xf]
      %v537 = vld [vmem:[%s1 + $0x84] sm:$0xf]
      %v538 = vld [vmem:[%s1 + $0x88] sm:$0xf]
      %v539 = vld [vmem:[%s1 + $0x8c] sm:$0xf]
      %v540 = vld [vmem:[%s1 + $0x90] sm:$0xf]
      %v541 = vld [vmem:[%s1 + $0x94] sm:$0xf]
      %v542 = vld [vmem:[%s1 + $0x98] sm:$0xf]
      %v543 = vld [vmem:[%s1 + $0x9c] sm:$0xf]
      %v544 = vld [vmem:[%s1 + $0xa0] sm:$0xf]
      %v545 = vld [vmem:[%s1 + $0xa4] sm:$0xf]
      %v546 = vld [vmem:[%s1 + $0xa8] sm:$0xf]
      %v547 = vld [vmem:[%s1 + $0xac] sm:$0xf]
      %v548 = vld [vmem:[%s1 + $0xb0] sm:$0xf]
      %v549 = vld [vmem:[%s1 + $0xb4] sm:$0xf]
      %v550 = vld [vmem:[%s1 + $0xb8] sm:$0xf]
      %v551 = vld [vmem:[%s1 + $0xbc] sm:$0xf]
      %v552 = vld [vmem:[%s1 + $0xc0] sm:$0xf]
      %v553 = vld [vmem:[%s1 + $0xc4] sm:$0xf]
      %v554 = vld [vmem:[%s1 + $0xc8] sm:$0xf]
      %v555 = vld [vmem:[%s1 + $0xcc] sm:$0xf]
      %v556 = vld [vmem:[%s1 + $0xd0] sm:$0xf]
      %v557 = vld [vmem:[%s1 + $0xd4] sm:$0xf]
      %v558 = vld [vmem:[%s1 + $0xd8] sm:$0xf]
      %v559 = vld [vmem:[%s1 + $0xdc] sm:$0xf]
      %v560 = vld [vmem:[%s1 + $0xe0] sm:$0xf]
      %v561 = vld [vmem:[%s1 + $0xe4] sm:$0xf]
      %v562 = vld [vmem:[%s1 + $0xe8] sm:$0xf]
      %v563 = vld [vmem:[%s1 + $0xec] sm:$0xf]
      %v564 = vld [vmem:[%s1 + $0xf0] sm:$0xf]
      %v565 = vld [vmem:[%s1 + $0xf4] sm:$0xf]
      %v566 = vld [vmem:[%s1 + $0xf8] sm:$0xf]
      %v567 = vld [vmem:[%s1 + $0xfc] sm:$0xf]
      %v568 = vld [vmem:[%s2] sm:$0x1]
      %v570 = vlaneseq
      %v571 = vshrl.u32 %v570, 7
      %v572 = vsub.s32 0, %v571
      %v573 = vrot.slane %v568, %v572
      %v639 = vunpack.c.l.b16 %v504
      %v640 = vunpack.c.l.b16 %v505
      %v641 = vunpack.c.l.b16 %v506
      %v642 = vunpack.c.l.b16 %v507
      %v643 = vunpack.c.l.b16 %v508
      %v644 = vunpack.c.l.b16 %v509
      %v645 = vunpack.c.l.b16 %v510
      %v646 = vunpack.c.l.b16 %v511
      %v647 = vunpack.c.l.b16 %v512
      %v648 = vunpack.c.l.b16 %v513
      %v649 = vunpack.c.l.b16 %v514
      %v650 = vunpack.c.l.b16 %v515
      %v651 = vunpack.c.l.b16 %v516
      %v652 = vunpack.c.l.b16 %v517
      %v653 = vunpack.c.l.b16 %v518
      %v654 = vunpack.c.l.b16 %v519
      %v655 = vunpack.c.l.b16 %v520
      %v656 = vunpack.c.l.b16 %v521
      %v657 = vunpack.c.l.b16 %v522
      %v658 = vunpack.c.l.b16 %v523
      %v659 = vunpack.c.l.b16 %v524
      %v660 = vunpack.c.l.b16 %v525
      %v661 = vunpack.c.l.b16 %v526
      %v662 = vunpack.c.l.b16 %v527
      %v663 = vunpack.c.l.b16 %v528
      %v664 = vunpack.c.l.b16 %v529
      %v665 = vunpack.c.l.b16 %v530
      %v666 = vunpack.c.l.b16 %v531
      %v667 = vunpack.c.l.b16 %v532
      %v668 = vunpack.c.l.b16 %v533
      %v669 = vunpack.c.l.b16 %v534
      %v670 = vunpack.c.l.b16 %v535
      %v671 = vunpack.c.l.b16 %v536
      %v672 = vunpack.c.l.b16 %v537
      %v673 = vunpack.c.l.b16 %v538
      %v674 = vunpack.c.l.b16 %v539
      %v675 = vunpack.c.l.b16 %v540
      %v676 = vunpack.c.l.b16 %v541
      %v677 = vunpack.c.l.b16 %v542
      %v678 = vunpack.c.l.b16 %v543
      %v679 = vunpack.c.l.b16 %v544
      %v680 = vunpack.c.l.b16 %v545
      %v681 = vunpack.c.l.b16 %v546
      %v682 = vunpack.c.l.b16 %v547
      %v683 = vunpack.c.l.b16 %v548
      %v684 = vunpack.c.l.b16 %v549
      %v685 = vunpack.c.l.b16 %v550
      %v686 = vunpack.c.l.b16 %v551
      %v687 = vunpack.c.l.b16 %v552
      %v688 = vunpack.c.l.b16 %v553
      %v689 = vunpack.c.l.b16 %v554
      %v690 = vunpack.c.l.b16 %v555
      %v691 = vunpack.c.l.b16 %v556
      %v692 = vunpack.c.l.b16 %v557
      %v693 = vunpack.c.l.b16 %v558
      %v694 = vunpack.c.l.b16 %v559
      %v695 = vunpack.c.l.b16 %v560
      %v696 = vunpack.c.l.b16 %v561
      %v697 = vunpack.c.l.b16 %v562
      %v698 = vunpack.c.l.b16 %v563
      %v699 = vunpack.c.l.b16 %v564
      %v700 = vunpack.c.l.b16 %v565
      %v701 = vunpack.c.l.b16 %v566
      %v702 = vunpack.c.l.b16 %v567
      %v703 = vpack.c.b16 %v640, %v639
      %v704 = vpack.c.b16 %v642, %v641
      %v705 = vpack.c.b16 %v644, %v643
      %v706 = vpack.c.b16 %v646, %v645
      %v707 = vpack.c.b16 %v648, %v647
      %v708 = vpack.c.b16 %v650, %v649
      %v709 = vpack.c.b16 %v652, %v651
      %v710 = vpack.c.b16 %v654, %v653
      %v711 = vpack.c.b16 %v656, %v655
      %v712 = vpack.c.b16 %v658, %v657
      %v713 = vpack.c.b16 %v660, %v659
      %v714 = vpack.c.b16 %v662, %v661
      %v715 = vpack.c.b16 %v664, %v663
      %v716 = vpack.c.b16 %v666, %v665
      %v717 = vpack.c.b16 %v668, %v667
      %v718 = vpack.c.b16 %v670, %v669
      %v719 = vpack.c.b16 %v672, %v671
      %v720 = vpack.c.b16 %v674, %v673
      %v721 = vpack.c.b16 %v676, %v675
      %v722 = vpack.c.b16 %v678, %v677
      %v723 = vpack.c.b16 %v680, %v679
      %v724 = vpack.c.b16 %v682, %v681
      %v725 = vpack.c.b16 %v684, %v683
      %v726 = vpack.c.b16 %v686, %v685
      %v727 = vpack.c.b16 %v688, %v687
      %v728 = vpack.c.b16 %v690, %v689
      %v729 = vpack.c.b16 %v692, %v691
      %v730 = vpack.c.b16 %v694, %v693
      %v731 = vpack.c.b16 %v696, %v695
      %v732 = vpack.c.b16 %v698, %v697
      %v733 = vpack.c.b16 %v700, %v699
      %v734 = vpack.c.b16 %v702, %v701
      %767 = vmatprep.subr.bf16.mxu0 0
      %768 = vmatpush1.bf16.msra.mxu0 %v703
      %769 = vmatprep.subr.bf16.mxu0 0
      %770 = vmatpush1.bf16.msra.mxu0 %v704
      %771 = vmatprep.subr.bf16.mxu0 0
      %772 = vmatpush1.bf16.msra.mxu0 %v705
      %773 = vmatprep.subr.bf16.mxu0 0
      %774 = vmatpush1.bf16.msra.mxu0 %v706
      %775 = vmatprep.subr.bf16.mxu0 0
      %776 = vmatpush1.bf16.msra.mxu0 %v707
      %777 = vmatprep.subr.bf16.mxu0 0
      %778 = vmatpush1.bf16.msra.mxu0 %v708
      %779 = vmatprep.subr.bf16.mxu0 0
      %780 = vmatpush1.bf16.msra.mxu0 %v709
      %781 = vmatprep.subr.bf16.mxu0 0
      %782 = vmatpush1.bf16.msra.mxu0 %v710
      %783 = vmatprep.subr.bf16.mxu0 0
      %784 = vmatpush1.bf16.msra.mxu0 %v711
      %785 = vmatprep.subr.bf16.mxu0 0
      %786 = vmatpush1.bf16.msra.mxu0 %v712
      %787 = vmatprep.subr.bf16.mxu0 0
      %788 = vmatpush1.bf16.msra.mxu0 %v713
      %789 = vmatprep.subr.bf16.mxu0 0
      %790 = vmatpush1.bf16.msra.mxu0 %v714
      %791 = vmatprep.subr.bf16.mxu0 0
      %792 = vmatpush1.bf16.msra.mxu0 %v715
      %793 = vmatprep.subr.bf16.mxu0 0
      %794 = vmatpush1.bf16.msra.mxu0 %v716
      %795 = vmatprep.subr.bf16.mxu0 0
      %796 = vmatpush1.bf16.msra.mxu0 %v717
      %797 = vmatprep.subr.bf16.mxu0 0
      %798 = vmatpush1.bf16.msra.mxu0 %v718
      %799 = vmatprep.mubr.bf16.mxu0 %v446
      %800 = vmatmul.mubr.bf16.gmra.mrb[0].mxu0 %v430
      %v801 = vpop.f32.mrb[0].mxu0
      %v802 = vadd.f32 %v573, %v801
      %v803 = vpop.f32.mrb[0].mxu0
      %v804 = vpop.f32.mrb[0].mxu0
      %v805 = vadd.f32 %v573, %v804
      %v806 = vpop.f32.mrb[0].mxu0
      %807 = vmatprep.mubr.bf16.mxu0 %v450
      %808 = vmatmul.mubr.bf16.gmra.mrb[0].mxu0 %v433
      %v809 = vpop.f32.mrb[0].mxu0
      %v810 = vadd.f32 %v573, %v809
      %v811 = vpop.f32.mrb[0].mxu0
      %v812 = vpop.f32.mrb[0].mxu0
      %v813 = vadd.f32 %v573, %v812
      %v814 = vpop.f32.mrb[0].mxu0
      %815 = vmatprep.mubr.bf16.mxu0 %v454
      %816 = vmatmul.mubr.bf16.gmra.mrb[0].mxu0 %v436
      %v817 = vpop.f32.mrb[0].mxu0
      %v818 = vadd.f32 %v573, %v817
      %v819 = vpop.f32.mrb[0].mxu0
      %v820 = vpop.f32.mrb[0].mxu0
      %v821 = vadd.f32 %v573, %v820
      %v822 = vpop.f32.mrb[0].mxu0
      %823 = vmatprep.mubr.bf16.mxu0 %v458
      %824 = vmatmul.mubr.bf16.gmra.mrb[0].mxu0 %v439
      %v825 = vpop.f32.mrb[0].mxu0
      %v826 = vadd.f32 %v573, %v825
      %v827 = vpop.f32.mrb[0].mxu0
      %v828 = vpop.f32.mrb[0].mxu0
      %v829 = vadd.f32 %v573, %v828
      %v830 = vpop.f32.mrb[0].mxu0
      %831 = vmatprep.mubr.bf16.mxu0 %v462
      %832 = vmatmul.mubr.bf16.gmra.mrb[0].mxu0 %v442
      %v833 = vpop.f32.mrb[0].mxu0
      %v834 = vadd.f32 %v573, %v833
      %v835 = vpop.f32.mrb[0].mxu0
      %v836 = vpop.f32.mrb[0].mxu0
      %v837 = vadd.f32 %v573, %v836
      %v838 = vpop.f32.mrb[0].mxu0
      %839 = vdwg.mxu0
      %840 = vmatprep.subr.bf16.mxu0 0
      %841 = vmatpush1.bf16.msra.mxu0 %v719
      %842 = vmatprep.subr.bf16.mxu0 0
      %843 = vmatpush1.bf16.msra.mxu0 %v720
      %844 = vmatprep.subr.bf16.mxu0 0
      %845 = vmatpush1.bf16.msra.mxu0 %v721
      %846 = vmatprep.subr.bf16.mxu0 0
      %847 = vmatpush1.bf16.msra.mxu0 %v722
      %848 = vmatprep.subr.bf16.mxu0 0
      %849 = vmatpush1.bf16.msra.mxu0 %v723
      %850 = vmatprep.subr.bf16.mxu0 0
      %851 = vmatpush1.bf16.msra.mxu0 %v724
      %852 = vmatprep.subr.bf16.mxu0 0
      %853 = vmatpush1.bf16.msra.mxu0 %v725
      %854 = vmatprep.subr.bf16.mxu0 0
      %855 = vmatpush1.bf16.msra.mxu0 %v726
      %856 = vmatprep.subr.bf16.mxu0 0
      %857 = vmatpush1.bf16.msra.mxu0 %v727
      %858 = vmatprep.subr.bf16.mxu0 0
      %859 = vmatpush1.bf16.msra.mxu0 %v728
      %860 = vmatprep.subr.bf16.mxu0 0
      %861 = vmatpush1.bf16.msra.mxu0 %v729
      %862 = vmatprep.subr.bf16.mxu0 0
      %863 = vmatpush1.bf16.msra.mxu0 %v730
      %864 = vmatprep.subr.bf16.mxu0 0
      %865 = vmatpush1.bf16.msra.mxu0 %v731
      %866 = vmatprep.subr.bf16.mxu0 0
      %867 = vmatpush1.bf16.msra.mxu0 %v732
      %868 = vmatprep.subr.bf16.mxu0 0
      %869 = vmatpush1.bf16.msra.mxu0 %v733
      %870 = vmatprep.subr.bf16.mxu0 0
      %871 = vmatpush1.bf16.msra.mxu0 %v734
      %872 = vmatprep.mubr.bf16.mxu0 %v486
      %873 = vmatmul.mubr.bf16.gmra.mrb[0].mxu0 %v466
      %v874 = vpop.f32.mrb[0].mxu0
      %v875 = vadd.f32 %v802, %v874
      %v876 = vpop.f32.mrb[0].mxu0
      %v877 = vpop.f32.mrb[0].mxu0
      %v878 = vadd.f32 %v805, %v877
      %v879 = vpop.f32.mrb[0].mxu0
      %880 = vmatprep.mubr.bf16.mxu0 %v490
      %881 = vmatmul.mubr.bf16.gmra.mrb[0].mxu0 %v470
      %v882 = vpop.f32.mrb[0].mxu0
      %v883 = vadd.f32 %v810, %v882
      %v884 = vpop.f32.mrb[0].mxu0
      %v885 = vpop.f32.mrb[0].mxu0
      %v886 = vadd.f32 %v813, %v885
      %v887 = vpop.f32.mrb[0].mxu0
      %888 = vmatprep.mubr.bf16.mxu0 %v494
      %889 = vmatmul.mubr.bf16.gmra.mrb[0].mxu0 %v474
      %v890 = vpop.f32.mrb[0].mxu0
      %v891 = vadd.f32 %v818, %v890
      %v892 = vpop.f32.mrb[0].mxu0
      %v893 = vpop.f32.mrb[0].mxu0
      %v894 = vadd.f32 %v821, %v893
      %v895 = vpop.f32.mrb[0].mxu0
      %896 = vmatprep.mubr.bf16.mxu0 %v498
      %897 = vmatmul.mubr.bf16.gmra.mrb[0].mxu0 %v478
      %v898 = vpop.f32.mrb[0].mxu0
      %v899 = vadd.f32 %v826, %v898
      %v900 = vpop.f32.mrb[0].mxu0
      %v901 = vpop.f32.mrb[0].mxu0
      %v902 = vadd.f32 %v829, %v901
      %v903 = vpop.f32.mrb[0].mxu0
      %904 = vmatprep.mubr.bf16.mxu0 %v502
      %905 = vmatmul.mubr.bf16.gmra.mrb[0].mxu0 %v482
      %v906 = vpop.f32.mrb[0].mxu0
      %v907 = vadd.f32 %v834, %v906
      %v908 = vpop.f32.mrb[0].mxu0
      %v909 = vpop.f32.mrb[0].mxu0
      %v910 = vadd.f32 %v837, %v909
      %v911 = vpop.f32.mrb[0].mxu0
      %912 = vdwg.mxu0
      %v913 = vmax.f32 %v875, 0.0
      %v914 = vmax.f32 %v878, 0.0
      %v915 = vmax.f32 %v883, 0.0
      %v916 = vmax.f32 %v886, 0.0
      %v917 = vmax.f32 %v891, 0.0
      %v918 = vmax.f32 %v894, 0.0
      %v919 = vmax.f32 %v899, 0.0
      %v920 = vmax.f32 %v902, 0.0
      %v921 = vmax.f32 %v907, 0.0
      %v922 = vmax.f32 %v910, 0.0
      %v923 = vpack.c.bf16 %v914, %v913
      %v924 = vpack.c.bf16 %v916, %v915
      %v925 = vpack.c.bf16 %v918, %v917
      %v926 = vpack.c.bf16 %v920, %v919
      %v927 = vpack.c.bf16 %v922, %v921
      %v933 = vunpack.c.l.b16 %v923
      %v934 = vunpack.c.h.b16 %v923
      %v935 = vunpack.c.l.b16 %v924
      %v936 = vunpack.c.h.b16 %v924
      %v937 = vunpack.c.l.b16 %v925
      %v938 = vunpack.c.h.b16 %v925
      %v939 = vunpack.c.l.b16 %v926
      %v940 = vunpack.c.h.b16 %v926
      %v941 = vunpack.c.l.b16 %v927
      %v942 = vunpack.c.h.b16 %v927
      %v943 = vpack.c.b16 %v933, %v933
      %v944 = vpack.c.b16 %v934, %v934
      %v945 = vpack.c.b16 %v935, %v935
      %v946 = vpack.c.b16 %v936, %v936
      %v947 = vpack.c.b16 %v937, %v937
      %v948 = vpack.c.b16 %v938, %v938
      %v949 = vpack.c.b16 %v939, %v939
      %v950 = vpack.c.b16 %v940, %v940
      %v951 = vpack.c.b16 %v941, %v941
      %v952 = vpack.c.b16 %v942, %v942
      %963 = vst [vmem:[%s150] sm:$0xf] %v943
      %964 = vst [vmem:[%s150 + $0x4] sm:$0xf] %v944
      %965 = vst [vmem:[%s150 + $0x8] sm:$0xf] %v945
      %966 = vst [vmem:[%s150 + $0xc] sm:$0xf] %v946
      %967 = vst [vmem:[%s150 + $0x10] sm:$0xf] %v947
      %968 = vst [vmem:[%s150 + $0x14] sm:$0xf] %v948
      %969 = vst [vmem:[%s150 + $0x18] sm:$0xf] %v949
      %970 = vst [vmem:[%s150 + $0x1c] sm:$0xf] %v950
      %971 = vst [vmem:[%s150 + $0x20] sm:$0xf] %v951
      %972 = vst [vmem:[%s150 + $0x24] sm:$0xf] %v952
      %s973 = smul.u32 10, %s14
      %p974 = scmp.lt.s32.totalorder %s973, 19
      %s975 = scalar_select %p974, %s973, 19
      %s976 = smul.addr %s975, 4
      %s977 = scalar_lea.vmem %s3, %s976
      // Predicated region
      $region33: #{forward.4} parent=31 // pred_check
        %p978 = pneg %p95
      $region34: #{forward.4} parent=31 // pred_check_branch
        %980 = sbr.rel (%p978) target = $region36
      $region35: #{forward.4} parent=31 // pred_region
        %s981 = smul.u32 10, %s14
      $region36: #{forward.4} parent=31 // pred_fallthru
        _
    $region32: #{forward.4} parent=5 // pred_fallthru
      _
    %p982 = scmp.le.s32.totalorder 2, %s9
    // Predicated region
    $region37: #{forward.4} parent=5 // pred_check
      %p983 = pneg %p982
    $region38: #{forward.4} parent=5 // pred_check_branch
      %985 = sbr.rel (%p983) target = $region40
    $region39: #{forward.4} parent=5 // pred_region
      %s986 = ssub.s32 %s9, 2
      // Predicated region
      $region41: #{forward.4} parent=39 // pred_check
        %p987 = pneg %p101
      $region42: #{forward.4} parent=39 // pred_check_branch
        %989 = sbr.rel (%p987) target = $region44
      $region43: #{forward.4} parent=39 // pred_region
        %s990 = smul.u32 10, %s15
        %p991 = scmp.lt.s32.totalorder %s990, 19
        %s992 = scalar_select %p991, %s990, 19
        %s993 = smul.addr %s992, 4
        %s994 = scalar_lea.vmem %s3, %s993
      $region44: #{forward.4} parent=39 // pred_fallthru
        _
    $region40: #{forward.4} parent=5 // pred_fallthru
      _
  $region6: #{forward.4} parent=0 // loop_footer
    %s13 = sadd.s32 1, %s9
  $region7: #{forward.4} parent=0 // loop_footer_branch
    %8 = sbr.rel target = $region3
  $region8: #{forward.4} parent=0 // loop_exit
    _

// kernel: forward.5
$region0: #{forward.5}
  #allocation0 [shape = 'u32[]', space=smem, size = 0x4, offset = 0x4, fixed_abs, tag = 'smem constant byte address 0x4 - core index']
  #allocation1 [shape = 'u32[144,128]{1,0:T(1,128)}', space=vmem, size = 0x12000, scoped, tag = 'internal scratch']
  %s0 = inlined_call_operand.vmem [shape: bf16[160,16], index: 0, kind: input, shape index: {}]
  %s1 = inlined_call_operand.vmem [shape: bf16[144,128], index: 1, kind: input, shape index: {}]
  %s2 = inlined_call_operand.vmem [shape: f32[1,128], index: 2, kind: input, shape index: {}]
  %s3 = inlined_call_operand.vmem [shape: f32[144,128], index: 3, kind: output, shape index: {}]
  %s4 = sld [smem:[#allocation0]]
  $region45: #{forward.5} parent=0
    _
  %s6 = ssub.s32 1, %s4
  %s7 = scalar_select 0, %s6, %s4
  loop: start=0, step=1, limit=4
  $region2: #{forward.5} parent=0 // loop_pre_header
    _
  $region3: #{forward.5} parent=0 // loop_header
    %s9 = sphi 0, %s13
    %p10 = scmp.ge.s32.totalorder %s9, 4
    %s17 = sphi 0, %s17
    %s19 = sphi 0, %s17
    %s20 = sphi 0, %s19
    %s34 = sphi 0, %s20
    %s38 = sphi 0, %s38
    %s40 = sphi 0, %s38
    %s41 = sphi 0, %s40
    %s55 = sphi 0, %s41
    %s59 = sphi 0, %s59
    %s61 = sphi 0, %s59
    %s62 = sphi 0, %s61
    %s76 = sphi 0, %s62
    %s82 = sphi 0, %s84
    %s85 = sphi 0, %s82
    %s86 = sphi 0, %s85
    %s102 = sphi 0, %s86
  $region4: #{forward.5} parent=0 // loop_header_branch
    %12 = sbr.rel (%p10) target = $region8
  $region5: #{forward.5} parent=0 // loop_body
    %s14 = ssub.s32 %s9, 1
    %s15 = ssub.s32 %s9, 2
    %s16 = sadd.s32 %s9, 1
    %s18 = sadd.s32 %s17, 1
    %p21 = scmp.eq.s32.totalorder %s9, 1
    %p22 = scmp.ne.s32.totalorder %s17, %s19
    %p23 = scmp.eq.s32.totalorder %s9, 0
    %p24 = por %p22, %p23
    %p25 = scmp.ne.s32.totalorder %s17, %s19
    %p26 = scmp.eq.s32.totalorder %s14, 1
    %p27 = por %p25, %p26
    %p28 = scmp.ne.s32.totalorder %s19, %s20
    %p29 = scmp.eq.s32.totalorder %s14, 0
    %p30 = por %p28, %p29
    %p31 = scmp.ne.s32.totalorder %s19, %s20
    %p32 = scmp.eq.s32.totalorder %s15, 1
    %p33 = por %p31, %p32
    %p35 = scmp.ne.s32.totalorder %s20, %s34
    %p36 = scmp.eq.s32.totalorder %s15, 0
    %p37 = por %p35, %p36
    %s39 = sadd.s32 %s38, 1
    %p42 = scmp.eq.s32.totalorder %s9, 1
    %p43 = scmp.ne.s32.totalorder %s38, %s40
    %p44 = scmp.eq.s32.totalorder %s9, 0
    %p45 = por %p43, %p44
    %p46 = scmp.ne.s32.totalorder %s38, %s40
    %p47 = scmp.eq.s32.totalorder %s14, 1
    %p48 = por %p46, %p47
    %p49 = scmp.ne.s32.totalorder %s40, %s41
    %p50 = scmp.eq.s32.totalorder %s14, 0
    %p51 = por %p49, %p50
    %p52 = scmp.ne.s32.totalorder %s40, %s41
    %p53 = scmp.eq.s32.totalorder %s15, 1
    %p54 = por %p52, %p53
    %p56 = scmp.ne.s32.totalorder %s41, %s55
    %p57 = scmp.eq.s32.totalorder %s15, 0
    %p58 = por %p56, %p57
    %s60 = sadd.s32 %s59, 1
    %p63 = scmp.eq.s32.totalorder %s9, 1
    %p64 = scmp.ne.s32.totalorder %s59, %s61
    %p65 = scmp.eq.s32.totalorder %s9, 0
    %p66 = por %p64, %p65
    %p67 = scmp.ne.s32.totalorder %s59, %s61
    %p68 = scmp.eq.s32.totalorder %s14, 1
    %p69 = por %p67, %p68
    %p70 = scmp.ne.s32.totalorder %s61, %s62
    %p71 = scmp.eq.s32.totalorder %s14, 0
    %p72 = por %p70, %p71
    %p73 = scmp.ne.s32.totalorder %s61, %s62
    %p74 = scmp.eq.s32.totalorder %s15, 1
    %p75 = por %p73, %p74
    %p77 = scmp.ne.s32.totalorder %s62, %s76
    %p78 = scmp.eq.s32.totalorder %s15, 0
    %p79 = por %p77, %p78
    %s80 = ssub.s32 %s9, %s16
    %p81 = scmp.eq.s32.totalorder %s80, 0
    %s83 = sadd.s32 %s82, 1
    %s84 = scalar_select %p81, %s82, %s83
    %p87 = pneg %p81
    %p88 = scmp.eq.s32.totalorder %s9, 1
    %p89 = por %p87, %p88
    %p90 = scmp.ne.s32.totalorder %s82, %s85
    %p91 = scmp.eq.s32.totalorder %s9, 0
    %p92 = por %p90, %p91
    %p93 = scmp.ne.s32.totalorder %s82, %s85
    %p94 = scmp.eq.s32.totalorder %s14, 1
    %p95 = por %p93, %p94
    %p96 = scmp.ne.s32.totalorder %s85, %s86
    %p97 = scmp.eq.s32.totalorder %s14, 0
    %p98 = por %p96, %p97
    %p99 = scmp.ne.s32.totalorder %s85, %s86
    %p100 = scmp.eq.s32.totalorder %s15, 1
    %p101 = por %p99, %p100
    %p103 = scmp.ne.s32.totalorder %s86, %s102
    %p104 = scmp.eq.s32.totalorder %s15, 0
    %p105 = por %p103, %p104
    %p106 = scmp.le.s32.totalorder 1, %s9
    %p107 = scmp.lt.s32.totalorder %s9, 3
    %p108 = pnand %p106, %p107
    %p109 = pneg %p108
    // Predicated region
    $region9: #{forward.5} parent=5 // pred_check
      _
    $region10: #{forward.5} parent=5 // pred_check_branch
      %111 = sbr.rel (%p108) target = $region12
    $region11: #{forward.5} parent=5 // pred_region
      %s112 = ssub.s32 %s9, 1
      // Predicated region
      $region13: #{forward.5} parent=11 // pred_check
        %p113 = pneg %p30
      $region14: #{forward.5} parent=11 // pred_check_branch
        %115 = sbr.rel (%p113) target = $region16
      $region15: #{forward.5} parent=11 // pred_region
        _
      $region16: #{forward.5} parent=11 // pred_fallthru
        _
      // Predicated region
      $region17: #{forward.5} parent=11 // pred_check
        %p116 = pneg %p51
      $region18: #{forward.5} parent=11 // pred_check_branch
        %118 = sbr.rel (%p116) target = $region20
      $region19: #{forward.5} parent=11 // pred_region
        _
      $region20: #{forward.5} parent=11 // pred_fallthru
        _
      // Predicated region
      $region21: #{forward.5} parent=11 // pred_check
        %p119 = pneg %p72
      $region22: #{forward.5} parent=11 // pred_check_branch
        %121 = sbr.rel (%p119) target = $region24
      $region23: #{forward.5} parent=11 // pred_region
        _
      $region24: #{forward.5} parent=11 // pred_fallthru
        _
    $region12: #{forward.5} parent=5 // pred_fallthru
      _
    %p122 = scmp.lt.s32.totalorder %s9, 2
    // Predicated region
    $region25: #{forward.5} parent=5 // pred_check
      %p123 = pneg %p122
    $region26: #{forward.5} parent=5 // pred_check_branch
      %125 = sbr.rel (%p123) target = $region28
    $region27: #{forward.5} parent=5 // pred_region
      _
    $region28: #{forward.5} parent=5 // pred_fallthru
      _
    %p126 = scmp.le.s32.totalorder 1, %s9
    %p127 = scmp.lt.s32.totalorder %s9, 3
    %p128 = pnand %p126, %p127
    %p129 = pneg %p128
    // Predicated region
    $region29: #{forward.5} parent=5 // pred_check
      _
    $region30: #{forward.5} parent=5 // pred_check_branch
      %131 = sbr.rel (%p128) target = $region32
    $region31: #{forward.5} parent=5 // pred_region
      %s132 = ssub.s32 %s9, 1
      %p133 = pneg %p30
      %p134 = pneg %p27
      %p135 = pneg %p51
      %p136 = pneg %p48
      %p137 = pneg %p72
      %p138 = pneg %p69
      %p139 = pneg %p98
      %p140 = pneg %p95
      %s141 = smul.u32 9, %s14
      %p142 = scmp.lt.s32.totalorder %s141, 17
      %s143 = scalar_select %p142, %s141, 17
      %s144 = smul.addr %s143, 8
      %s145 = scalar_lea.vmem %s3, %s144
      %s146 = smul.u32 9, %s14
      %p147 = scmp.lt.s32.totalorder %s146, 17
      %s148 = scalar_select %p147, %s146, 17
      %s149 = smul.addr %s148, 8
      %s150 = scalar_lea.vmem %s3, %s149
      %s151 = smul.u32 9, %s14
      %s153 = smul.u32 %s14, 72
      %s154 = sshra.s32 %s153, 3
      %s155 = sand.u32 %s153, 7
      %s156 = smul.addr %s154, 4
      %s157 = scalar_lea.vmem %s0, %s156
      %v158 = vld [vmem:[%s157] sm:$0xf]
      %v159 = vld [vmem:[%s157 + $0x4] sm:$0xf]
      %v160 = vld [vmem:[%s157 + $0x8] sm:$0xf]
      %v161 = vld [vmem:[%s157 + $0xc] sm:$0xf]
      %v162 = vld [vmem:[%s157 + $0x10] sm:$0xf]
      %v163 = vld [vmem:[%s157 + $0x14] sm:$0xf]
      %v164 = vld [vmem:[%s157 + $0x18] sm:$0xf]
      %v165 = vld [vmem:[%s157 + $0x1c] sm:$0xf]
      %v166 = vld [vmem:[%s157 + $0x20] sm:$0xf]
      %v167 = vld [vmem:[%s157 + $0x24] sm:$0xf]
      %v168 = vld [vmem:[%s157 + $0x28] sm:$0xf]
      %v178 = vunpack.c.l.b16 %v158
      %v179 = vunpack.c.l.b16 %v159
      %v180 = vunpack.c.l.b16 %v160
      %v181 = vunpack.c.l.b16 %v161
      %v182 = vunpack.c.l.b16 %v162
      %v183 = vunpack.c.l.b16 %v163
      %v184 = vunpack.c.l.b16 %v164
      %v185 = vunpack.c.l.b16 %v165
      %v186 = vunpack.c.l.b16 %v166
      %v187 = vpack.c.b16 %v179, %v178
      %v188 = vpack.c.b16 %v181, %v180
      %v189 = vpack.c.b16 %v183, %v182
      %v190 = vpack.c.b16 %v185, %v184
      %v191 = vpack.c.b16 %v186, %v186
      %v193 = vunpack.c.l.b16 %v167
      %v194 = vpack.c.b16 %v193, %v186
      %vm195 = vsmask.f32 7424
      %v197 = vshrl.u32 %v187, 16
      %v199 = vshll.u32 %v187, 16
      %v201 = vrot.slane %v199, 1
      %v202 = vor.u32 %v197, %v201
      %v204 = vshll.u32 %v188, 16
      %v206 = vrot.slane %v204, 1
      %v207 = vsel %vm195, %v202, %v206
      %v208 = vshrl.u32 %v188, 16
      %v210 = vor.u32 %v208, %v206
      %v212 = vshll.u32 %v189, 16
      %v214 = vrot.slane %v212, 1
      %v215 = vsel %vm195, %v210, %v214
      %v216 = vshrl.u32 %v189, 16
      %v218 = vor.u32 %v216, %v214
      %v220 = vshll.u32 %v190, 16
      %v222 = vrot.slane %v220, 1
      %v223 = vsel %vm195, %v218, %v222
      %v224 = vshrl.u32 %v190, 16
      %v226 = vor.u32 %v224, %v222
      %v228 = vshll.u32 %v194, 16
      %v230 = vrot.slane %v228, 1
      %v231 = vsel %vm195, %v226, %v230
      %v232 = vshrl.u32 %v194, 16
      %v234 = vor.u32 %v232, %v230
      %235 = vrot.lane.b32.xlu0 %v207, 16
      %v236 = vpop.permute.xlu0 %235
      %237 = vrot.lane.b32.xlu0 %v215, 16
      %v238 = vpop.permute.xlu0 %237
      %239 = vrot.lane.b32.xlu0 %v223, 16
      %v240 = vpop.permute.xlu0 %239
      %241 = vrot.lane.b32.xlu0 %v231, 16
      %v242 = vpop.permute.xlu0 %241
      %243 = vrot.lane.b32.xlu0 %v234, 16
      %v244 = vpop.permute.xlu0 %243
      %vm245 = vcmask 1046528
      %v246 = vrot.slane %v187, 1
      %v247 = vrot.slane %v188, 1
      %v248 = vsel %vm245, %v246, %v247
      %v249 = vrot.slane %v189, 1
      %v250 = vsel %vm245, %v247, %v249
      %v251 = vrot.slane %v190, 1
      %v252 = vsel %vm245, %v249, %v251
      %v253 = vrot.slane %v194, 1
      %v254 = vsel %vm245, %v251, %v253
      %255 = vrot.lane.b32.xlu0 %v248, 32
      %v256 = vpop.permute.xlu0 %255
      %257 = vrot.lane.b32.xlu0 %v250, 32
      %v258 = vpop.permute.xlu0 %257
      %259 = vrot.lane.b32.xlu0 %v252, 32
      %v260 = vpop.permute.xlu0 %259
      %261 = vrot.lane.b32.xlu0 %v254, 32
      %v262 = vpop.permute.xlu0 %261
      %263 = vrot.lane.b32.xlu0 %v253, 32
      %v264 = vpop.permute.xlu0 %263
      %vm265 = vcmask 1044480
      %v266 = vrot.slane %v187, 3
      %v267 = vrot.slane %v188, 3
      %v268 = vsel %vm265, %v266, %v267
      %v269 = vrot.slane %v189, 3
      %v270 = vsel %vm265, %v267, %v269
      %v271 = vrot.slane %v190, 3
      %v272 = vsel %vm265, %v269, %v271
      %v273 = vrot.slane %v194, 3
      %v274 = vsel %vm265, %v271, %v273
      %275 = vrot.lane.b32.xlu0 %v268, 48
      %v276 = vpop.permute.xlu0 %275
      %277 = vrot.lane.b32.xlu0 %v270, 48
      %v278 = vpop.permute.xlu0 %277
      %279 = vrot.lane.b32.xlu0 %v272, 48
      %v280 = vpop.permute.xlu0 %279
      %281 = vrot.lane.b32.xlu0 %v274, 48
      %v282 = vpop.permute.xlu0 %281
      %283 = vrot.lane.b32.xlu0 %v273, 48
      %v284 = vpop.permute.xlu0 %283
      %vm285 = vsmask.f32 4352
      %v286 = vrot.slane %v197, 3
      %v287 = vrot.slane %v199, 4
      %v288 = vor.u32 %v286, %v287
      %v289 = vrot.slane %v208, 3
      %v290 = vrot.slane %v204, 4
      %v291 = vor.u32 %v289, %v290
      %v292 = vsel %vm285, %v288, %v291
      %v293 = vrot.slane %v216, 3
      %v294 = vrot.slane %v212, 4
      %v295 = vor.u32 %v293, %v294
      %v296 = vsel %vm285, %v291, %v295
      %v297 = vrot.slane %v224, 3
      %v298 = vrot.slane %v220, 4
      %v299 = vor.u32 %v297, %v298
      %v300 = vsel %vm285, %v295, %v299
      %v301 = vrot.slane %v232, 3
      %v302 = vrot.slane %v228, 4
      %v303 = vor.u32 %v301, %v302
      %v304 = vsel %vm285, %v299, %v303
      %305 = vrot.lane.b32.xlu0 %v292, 64
      %v306 = vpop.permute.xlu0 %305
      %307 = vrot.lane.b32.xlu0 %v296, 64
      %v308 = vpop.permute.xlu0 %307
      %309 = vrot.lane.b32.xlu0 %v300, 64
      %v310 = vpop.permute.xlu0 %309
      %311 = vrot.lane.b32.xlu0 %v304, 64
      %v312 = vpop.permute.xlu0 %311
      %313 = vrot.lane.b32.xlu0 %v303, 64
      %v314 = vpop.permute.xlu0 %313
      %v315 = vpack.c.b16 %v180, %v179
      %v316 = vpack.c.b16 %v182, %v181
      %v317 = vpack.c.b16 %v184, %v183
      %v318 = vpack.c.b16 %v186, %v185
      %v319 = vpack.c.b16 %v193, %v193
      %320 = vrot.lane.b32.xlu0 %v315, 80
      %v321 = vpop.permute.xlu0 %320
      %322 = vrot.lane.b32.xlu0 %v316, 80
      %v323 = vpop.permute.xlu0 %322
      %324 = vrot.lane.b32.xlu0 %v317, 80
      %v325 = vpop.permute.xlu0 %324
      %326 = vrot.lane.b32.xlu0 %v318, 80
      %v327 = vpop.permute.xlu0 %326
      %328 = vrot.lane.b32.xlu0 %v319, 80
      %v329 = vpop.permute.xlu0 %328
      %v331 = vunpack.c.l.b16 %v168
      %v332 = vpack.c.b16 %v331, %v193
      %vm333 = vcmask 1045504
      %v334 = vrot.slane %v315, 2
      %v335 = vrot.slane %v316, 2
      %v336 = vsel %vm333, %v334, %v335
      %v337 = vrot.slane %v317, 2
      %v338 = vsel %vm333, %v335, %v337
      %v339 = vrot.slane %v318, 2
      %v340 = vsel %vm333, %v337, %v339
      %v341 = vrot.slane %v332, 2
      %v342 = vsel %vm333, %v339, %v341
      %343 = vrot.lane.b32.xlu0 %v336, 96
      %v344 = vpop.permute.xlu0 %343
      %345 = vrot.lane.b32.xlu0 %v338, 96
      %v346 = vpop.permute.xlu0 %345
      %347 = vrot.lane.b32.xlu0 %v340, 96
      %v348 = vpop.permute.xlu0 %347
      %349 = vrot.lane.b32.xlu0 %v342, 96
      %v350 = vpop.permute.xlu0 %349
      %351 = vrot.lane.b32.xlu0 %v341, 96
      %v352 = vpop.permute.xlu0 %351
      %vm353 = vsmask.f32 5376
      %v355 = vshrl.u32 %v315, 16
      %v357 = vrot.slane %v355, 2
      %v358 = vshll.u32 %v315, 16
      %v360 = vrot.slane %v358, 3
      %v361 = vor.u32 %v357, %v360
      %v363 = vshrl.u32 %v316, 16
      %v365 = vrot.slane %v363, 2
      %v366 = vshll.u32 %v316, 16
      %v368 = vrot.slane %v366, 3
      %v369 = vor.u32 %v365, %v368
      %v370 = vsel %vm353, %v361, %v369
      %v372 = vshrl.u32 %v317, 16
      %v374 = vrot.slane %v372, 2
      %v375 = vshll.u32 %v317, 16
      %v377 = vrot.slane %v375, 3
      %v378 = vor.u32 %v374, %v377
      %v379 = vsel %vm353, %v369, %v378
      %v381 = vshrl.u32 %v318, 16
      %v383 = vrot.slane %v381, 2
      %v384 = vshll.u32 %v318, 16
      %v386 = vrot.slane %v384, 3
      %v387 = vor.u32 %v383, %v386
      %v388 = vsel %vm353, %v378, %v387
      %v390 = vshrl.u32 %v332, 16
      %v392 = vrot.slane %v390, 2
      %v393 = vshll.u32 %v332, 16
      %v395 = vrot.slane %v393, 3
      %v396 = vor.u32 %v392, %v395
      %v397 = vsel %vm353, %v387, %v396
      %398 = vrot.lane.b32.xlu0 %v370, 112
      %v399 = vpop.permute.xlu0 %398
      %400 = vrot.lane.b32.xlu0 %v379, 112
      %v401 = vpop.permute.xlu0 %400
      %402 = vrot.lane.b32.xlu0 %v388, 112
      %v403 = vpop.permute.xlu0 %402
      %404 = vrot.lane.b32.xlu0 %v397, 112
      %v405 = vpop.permute.xlu0 %404
      %406 = vrot.lane.b32.xlu0 %v396, 112
      %v407 = vpop.permute.xlu0 %406
      %v408 = vrot.slane %v315, 3
      %v409 = vrot.slane %v316, 3
      %v410 = vsel %vm265, %v408, %v409
      %v411 = vrot.slane %v317, 3
      %v412 = vsel %vm265, %v409, %v411
      %v413 = vrot.slane %v318, 3
      %v414 = vsel %vm265, %v411, %v413
      %v415 = vrot.slane %v332, 3
      %v416 = vsel %vm265, %v413, %v415
      %vm417 = vcmask 130048
      %v419 = vsel %vm417, %v187, %v236
      %v421 = vsel %vm417, %v188, %v238
      %v423 = vsel %vm417, %v189, %v240
      %v425 = vsel %vm417, %v190, %v242
      %v428 = vsel %vm417, %v191, %v244
      %vm429 = vcmask 261120
      %v431 = vsel %vm429, %v419, %v256
      %v433 = vsel %vm429, %v421, %v258
      %v435 = vsel %vm429, %v423, %v260
      %v437 = vsel %vm429, %v425, %v262
      %v439 = vsel %vm429, %v428, %v264
      %vm440 = vcmask 392192
      %v442 = vsel %vm440, %v431, %v276
      %v444 = vsel %vm440, %v433, %v278
      %v446 = vsel %vm440, %v435, %v280
      %v448 = vsel %vm440, %v437, %v282
      %v450 = vsel %vm440, %v439, %v284
      %vm451 = vcmask 523264
      %v453 = vsel %vm451, %v442, %v306
      %v455 = vsel %vm451, %v444, %v308
      %v457 = vsel %vm451, %v446, %v310
      %v459 = vsel %vm451, %v448, %v312
      %v461 = vsel %vm451, %v450, %v314
      %vm462 = vcmask 654336
      %v464 = vsel %vm462, %v453, %v321
      %v466 = vsel %vm462, %v455, %v323
      %v468 = vsel %vm462, %v457, %v325
      %v470 = vsel %vm462, %v459, %v327
      %v472 = vsel %vm462, %v461, %v329
      %vm473 = vcmask 785408
      %v475 = vsel %vm473, %v464, %v344
      %v477 = vsel %vm473, %v466, %v346
      %v479 = vsel %vm473, %v468, %v348
      %v481 = vsel %vm473, %v470, %v350
      %v483 = vsel %vm473, %v472, %v352
      %vm484 = vcmask 916480
      %v486 = vsel %vm484, %v475, %v399
      %v489 = vsel %vm484, %v477, %v401
      %v492 = vsel %vm484, %v479, %v403
      %v495 = vsel %vm484, %v481, %v405
      %v498 = vsel %vm484, %v483, %v407
      %v500 = vld [vmem:[%s1] sm:$0xf]
      %v501 = vld [vmem:[%s1 + $0x4] sm:$0xf]
      %v502 = vld [vmem:[%s1 + $0x8] sm:$0xf]
      %v503 = vld [vmem:[%s1 + $0xc] sm:$0xf]
      %v504 = vld [vmem:[%s1 + $0x10] sm:$0xf]
      %v505 = vld [vmem:[%s1 + $0x14] sm:$0xf]
      %v506 = vld [vmem:[%s1 + $0x18] sm:$0xf]
      %v507 = vld [vmem:[%s1 + $0x1c] sm:$0xf]
      %v508 = vld [vmem:[%s1 + $0x20] sm:$0xf]
      %v509 = vld [vmem:[%s1 + $0x24] sm:$0xf]
      %v510 = vld [vmem:[%s1 + $0x28] sm:$0xf]
      %v511 = vld [vmem:[%s1 + $0x2c] sm:$0xf]
      %v512 = vld [vmem:[%s1 + $0x30] sm:$0xf]
      %v513 = vld [vmem:[%s1 + $0x34] sm:$0xf]
      %v514 = vld [vmem:[%s1 + $0x38] sm:$0xf]
      %v515 = vld [vmem:[%s1 + $0x3c] sm:$0xf]
      %v516 = vld [vmem:[%s1 + $0x40] sm:$0xf]
      %v517 = vld [vmem:[%s1 + $0x44] sm:$0xf]
      %v518 = vld [vmem:[%s2] sm:$0x1]
      %v520 = vlaneseq
      %v521 = vshrl.u32 %v520, 7
      %v522 = vsub.s32 0, %v521
      %v523 = vrot.slane %v518, %v522
      %v543 = vunpack.c.l.b16 %v500
      %v544 = vunpack.c.l.b16 %v501
      %v545 = vunpack.c.l.b16 %v502
      %v546 = vunpack.c.l.b16 %v503
      %v547 = vunpack.c.l.b16 %v504
      %v548 = vunpack.c.l.b16 %v505
      %v549 = vunpack.c.l.b16 %v506
      %v550 = vunpack.c.l.b16 %v507
      %v551 = vunpack.c.l.b16 %v508
      %v552 = vunpack.c.l.b16 %v509
      %v553 = vunpack.c.l.b16 %v510
      %v554 = vunpack.c.l.b16 %v511
      %v555 = vunpack.c.l.b16 %v512
      %v556 = vunpack.c.l.b16 %v513
      %v557 = vunpack.c.l.b16 %v514
      %v558 = vunpack.c.l.b16 %v515
      %v559 = vunpack.c.l.b16 %v516
      %v560 = vunpack.c.l.b16 %v517
      %v561 = vpack.c.b16 %v544, %v543
      %v562 = vpack.c.b16 %v546, %v545
      %v563 = vpack.c.b16 %v548, %v547
      %v564 = vpack.c.b16 %v550, %v549
      %v565 = vpack.c.b16 %v552, %v551
      %v566 = vpack.c.b16 %v554, %v553
      %v567 = vpack.c.b16 %v556, %v555
      %v568 = vpack.c.b16 %v558, %v557
      %v569 = vpack.c.b16 %v560, %v559
      %v580 = vsel %vm417, %v410, 0
      %v583 = vsel %vm417, %v412, 0
      %v586 = vsel %vm417, %v414, 0
      %v589 = vsel %vm417, %v416, 0
      %v592 = vsel %vm417, %v415, 0
      %594 = vmatprep.subr.bf16.mxu0 0
      %595 = vmatpush1.bf16.msra.mxu0 %v561
      %596 = vmatprep.subr.bf16.mxu0 0
      %597 = vmatpush1.bf16.msra.mxu0 %v562
      %598 = vmatprep.subr.bf16.mxu0 0
      %599 = vmatpush1.bf16.msra.mxu0 %v563
      %600 = vmatprep.subr.bf16.mxu0 0
      %601 = vmatpush1.bf16.msra.mxu0 %v564
      %602 = vmatprep.subr.bf16.mxu0 0
      %603 = vmatpush1.bf16.msra.mxu0 %v565
      %604 = vmatprep.subr.bf16.mxu0 0
      %605 = vmatpush1.bf16.msra.mxu0 %v566
      %606 = vmatprep.subr.bf16.mxu0 0
      %607 = vmatpush1.bf16.msra.mxu0 %v567
      %608 = vmatprep.subr.bf16.mxu0 0
      %609 = vmatpush1.bf16.msra.mxu0 %v568
      %610 = vmatprep.subr.bf16.mxu0 0
      %611 = vmatpush1.bf16.msra.mxu0 %v569
      %612 = vmatprep.subr.bf16.mxu0 0
      %613 = vmatpush1.bf16.msra.mxu0 0
      %614 = vmatprep.subr.bf16.mxu0 0
      %615 = vmatpush1.bf16.msra.mxu0 0
      %616 = vmatprep.subr.bf16.mxu0 0
      %617 = vmatpush1.bf16.msra.mxu0 0
      %618 = vmatprep.subr.bf16.mxu0 0
      %619 = vmatpush1.bf16.msra.mxu0 0
      %620 = vmatprep.subr.bf16.mxu0 0
      %621 = vmatpush1.bf16.msra.mxu0 0
      %622 = vmatprep.subr.bf16.mxu0 0
      %623 = vmatpush1.bf16.msra.mxu0 0
      %624 = vmatprep.subr.bf16.mxu0 0
      %625 = vmatpush1.bf16.msra.mxu0 0
      %626 = vmatprep.mubr.bf16.mxu0 %v580
      %627 = vmatmul.mubr.bf16.gmra.mrb[0].mxu0 %v486
      %v628 = vpop.f32.mrb[0].mxu0
      %v629 = vadd.f32 %v523, %v628
      %v630 = vpop.f32.mrb[0].mxu0
      %v631 = vpop.f32.mrb[0].mxu0
      %v632 = vadd.f32 %v523, %v631
      %v633 = vpop.f32.mrb[0].mxu0
      %634 = vmatprep.mubr.bf16.mxu0 %v583
      %635 = vmatmul.mubr.bf16.gmra.mrb[0].mxu0 %v489
      %v636 = vpop.f32.mrb[0].mxu0
      %v637 = vadd.f32 %v523, %v636
      %v638 = vpop.f32.mrb[0].mxu0
      %v639 = vpop.f32.mrb[0].mxu0
      %v640 = vadd.f32 %v523, %v639
      %v641 = vpop.f32.mrb[0].mxu0
      %642 = vmatprep.mubr.bf16.mxu0 %v586
      %643 = vmatmul.mubr.bf16.gmra.mrb[0].mxu0 %v492
      %v644 = vpop.f32.mrb[0].mxu0
      %v645 = vadd.f32 %v523, %v644
      %v646 = vpop.f32.mrb[0].mxu0
      %v647 = vpop.f32.mrb[0].mxu0
      %v648 = vadd.f32 %v523, %v647
      %v649 = vpop.f32.mrb[0].mxu0
      %650 = vmatprep.mubr.bf16.mxu0 %v589
      %651 = vmatmul.mubr.bf16.gmra.mrb[0].mxu0 %v495
      %v652 = vpop.f32.mrb[0].mxu0
      %v653 = vadd.f32 %v523, %v652
      %v654 = vpop.f32.mrb[0].mxu0
      %v655 = vpop.f32.mrb[0].mxu0
      %v656 = vadd.f32 %v523, %v655
      %v657 = vpop.f32.mrb[0].mxu0
      %658 = vmatprep.mubr.bf16.mxu0 %v592
      %659 = vmatmul.mubr.bf16.gmra.mrb[0].mxu0 %v498
      %v660 = vpop.f32.mrb[0].mxu0
      %v661 = vadd.f32 %v523, %v660
      %v662 = vpop.f32.mrb[0].mxu0
      %v663 = vpop.f32.mrb[0].mxu0
      %v664 = vpop.f32.mrb[0].mxu0
      %665 = vdwg.mxu0
      %v666 = vmax.f32 %v629, 0.0
      %v667 = vmax.f32 %v632, 0.0
      %v668 = vmax.f32 %v637, 0.0
      %v669 = vmax.f32 %v640, 0.0
      %v670 = vmax.f32 %v645, 0.0
      %v671 = vmax.f32 %v648, 0.0
      %v672 = vmax.f32 %v653, 0.0
      %v673 = vmax.f32 %v656, 0.0
      %v674 = vmax.f32 %v661, 0.0
      %675 = vst [vmem:[%s150] sm:$0xff] %v666
      %676 = vst [vmem:[%s150 + $0x8] sm:$0xff] %v667
      %677 = vst [vmem:[%s150 + $0x10] sm:$0xff] %v668
      %678 = vst [vmem:[%s150 + $0x18] sm:$0xff] %v669
      %679 = vst [vmem:[%s150 + $0x20] sm:$0xff] %v670
      %680 = vst [vmem:[%s150 + $0x28] sm:$0xff] %v671
      %681 = vst [vmem:[%s150 + $0x30] sm:$0xff] %v672
      %682 = vst [vmem:[%s150 + $0x38] sm:$0xff] %v673
      %683 = vst [vmem:[%s150 + $0x40] sm:$0xff] %v674
      %s684 = smul.u32 9, %s14
      %p685 = scmp.lt.s32.totalorder %s684, 17
      %s686 = scalar_select %p685, %s684, 17
      %s687 = smul.addr %s686, 8
      %s688 = scalar_lea.vmem %s3, %s687
      // Predicated region
      $region33: #{forward.5} parent=31 // pred_check
        %p689 = pneg %p95
      $region34: #{forward.5} parent=31 // pred_check_branch
        %691 = sbr.rel (%p689) target = $region36
      $region35: #{forward.5} parent=31 // pred_region
        %s692 = smul.u32 9, %s14
      $region36: #{forward.5} parent=31 // pred_fallthru
        _
    $region32: #{forward.5} parent=5 // pred_fallthru
      _
    %p693 = scmp.le.s32.totalorder 2, %s9
    // Predicated region
    $region37: #{forward.5} parent=5 // pred_check
      %p694 = pneg %p693
    $region38: #{forward.5} parent=5 // pred_check_branch
      %696 = sbr.rel (%p694) target = $region40
    $region39: #{forward.5} parent=5 // pred_region
      %s697 = ssub.s32 %s9, 2
      // Predicated region
      $region41: #{forward.5} parent=39 // pred_check
        %p698 = pneg %p101
      $region42: #{forward.5} parent=39 // pred_check_branch
        %700 = sbr.rel (%p698) target = $region44
      $region43: #{forward.5} parent=39 // pred_region
        %s701 = smul.u32 9, %s15
        %p702 = scmp.lt.s32.totalorder %s701, 17
        %s703 = scalar_select %p702, %s701, 17
        %s704 = smul.addr %s703, 8
        %s705 = scalar_lea.vmem %s3, %s704
      $region44: #{forward.5} parent=39 // pred_fallthru
        _
    $region40: #{forward.5} parent=5 // pred_fallthru
      _
  $region6: #{forward.5} parent=0 // loop_footer
    %s13 = sadd.s32 1, %s9
  $region7: #{forward.5} parent=0 // loop_footer_branch
    %8 = sbr.rel target = $region3
  $region8: #{forward.5} parent=0 // loop_exit
    _

</llo_original>
